<compile_context>
chip_gen: v6e
topology: v6e:2x2x1
jax: 0.10.0
libtpu: 0.0.40
codegen_flags: <defaults>
</compile_context>

<pallas_src>
import jax
import jax.numpy as jnp
from jax import lax
from jax.experimental import pallas as pl
from jax.experimental.pallas import tpu as pltpu


def attention_kernel(z_ref, w1_ref, b1_ref, w2_ref, o_ref):
    # z_ref : (TB, N, D) tile of TB batch elements
    # w1_ref: (D, H)  first linear weight (pre-transposed)
    # b1_ref: (1, H)  first linear bias
    # w2_ref: (H, H)  second linear weight (pre-transposed, no bias)
    # o_ref : (TB, D) output tile
    TB, N, D = z_ref.shape
    H = w1_ref.shape[1]

    z = z_ref[...]                          # keep input dtype for the MXU
    z2 = z.reshape(TB * N, D)               # collapse batch+seq -> big MXU M-dim

    # project: Linear -> Tanh -> Linear (one matmul pair per grid step)
    h = jnp.tanh(
        jnp.dot(z2, w1_ref[...],
                preferred_element_type=jnp.float32,
                precision=lax.Precision.HIGHEST)
        + b1_ref[...]
    )                                                              # (TB*N, H) f32
    w = jnp.dot(h, w2_ref[...].astype(h.dtype),
                preferred_element_type=jnp.float32,
                precision=lax.Precision.HIGHEST)                   # (TB*N, H) f32
    w = w.reshape(TB, N, H)

    # Numerically-stable softmax over the sequence axis without materializing beta:
    #   out[b, h] = sum_n e[b, n, h] * z[b, n, h] / sum_n e[b, n, h]
    m = jnp.max(w, axis=1, keepdims=True)                          # (TB, 1, H)
    e = jnp.exp(w - m)                                             # (TB, N, H)
    denom = jnp.sum(e, axis=1)                                     # (TB, H)
    acc = jnp.sum(e * z.astype(jnp.float32), axis=1)               # (TB, D), needs H == D
    # Exact division: the approx reciprocal was the cause of the previous
    # reference mismatch; this elementwise divide is negligible next to the MXU work.
    o_ref[...] = (acc / denom).astype(o_ref.dtype)


def _choose_block_b(B, N):
    """Pick TB: ~1024 (TB*N) rows per step, TB multiple of 8, grid >= 2 if possible."""
    if B <= 8:
        return B                       # single step; block dim == full batch dim
    tb = max(8, (max(1, 1024 // max(N, 1)) // 8) * 8)
    half = ((B + 1) // 2 + 7) // 8 * 8     # ~B/2, rounded up to a multiple of 8
    return max(8, min(tb, half))


def attention_forward(z, w1_t, b1, w2_t, *, block_b=None):
    """z: (B, N, D); w1_t: (D, H); b1: (H,); w2_t: (H, H). Returns (B, D)."""
    B, N, D = z.shape
    H = w1_t.shape[1]
    assert H == D, "PyTorch forward only broadcasts when hidden_size == in_size"
    b1_2d = b1.reshape(1, H)

    tb = block_b if block_b is not None else _choose_block_b(B, N)
    B_pad = ((B + tb - 1) // tb) * tb
    z_p = z if B_pad == B else jnp.pad(z, ((0, B_pad - B), (0, 0), (0, 0)))

    # Per-step VMEM estimate: z (2 bufs) + weights (2 bufs) + out (2 bufs)
    # + f32 intermediates (h, w/e, acc...). Clamp into [32 MiB, 56 MiB] so it is
    # above the v5e/v6e scoped defaults and below v7x's 64 MiB physical VMEM.
    itemsize = jnp.dtype(z.dtype).itemsize
    need = (2 * tb * N * D * itemsize
            + 2 * (D * H + H + H * H) * 4
            + 2 * tb * D * itemsize
            + 4 * tb * N * max(D, H) * 4)
    vmem_limit = int(min(56 * 1024 * 1024, max(32 * 1024 * 1024, 2 * need)))

    out = pl.pallas_call(
        attention_kernel,
        out_shape=jax.ShapeDtypeStruct((B_pad, D), z.dtype),
        grid_spec=pltpu.PrefetchScalarGridSpec(
            num_scalar_prefetch=0,
            grid=(B_pad // tb,),
            in_specs=[
                pl.BlockSpec((tb, N, D), lambda b: (b, 0, 0)),   # z tile
                pl.BlockSpec((D, H), lambda b: (0, 0)),          # W1^T (resident)
                pl.BlockSpec((1, H), lambda b: (0, 0)),          # b1   (resident)
                pl.BlockSpec((H, H), lambda b: (0, 0)),          # W2^T (resident)
            ],
            out_specs=pl.BlockSpec((tb, D), lambda b: (b, 0)),
        ),
        compiler_params=pltpu.CompilerParams(
            dimension_semantics=("parallel",),
            vmem_limit_bytes=vmem_limit,
        ),
    )(z_p, w1_t, b1_2d, w2_t)

    return out[:B] if B_pad != B else out


def reference_forward(z, w1_t, b1, w2_t):
    """Pure-JAX reference mirroring the PyTorch module."""
    h = jnp.tanh(jnp.einsum("bnd,dh->bnh", z, w1_t,
                            precision=lax.Precision.HIGHEST) + b1)
    w = jnp.einsum("bnh,hk->bnk", h, w2_t, precision=lax.Precision.HIGHEST)
    beta = jax.nn.softmax(w, axis=1)
    return (beta * z).sum(axis=1)


if __name__ == "__main__":
    # Small shapes: batch=16 (so TB=8 gives a 2-step parallel grid), seq=8,
    # in_size = hidden_size = 32.
    B, N, D = 16, 8, 32
    H = D

    key = jax.random.PRNGKey(0)
    kz, k1, kb, k2 = jax.random.split(key, 4)

    z = jax.random.normal(kz, (B, N, D), dtype=jnp.float32)

    # Deterministic params mimicking PyTorch Linear default init (+-1/sqrt(fan_in))
    bound1 = 1.0 / jnp.sqrt(D)
    w1 = jax.random.uniform(k1, (H, D), minval=-bound1, maxval=bound1, dtype=jnp.float32)
    b1 = jax.random.uniform(kb, (H,), minval=-bound1, maxval=bound1, dtype=jnp.float32)
    bound2 = 1.0 / jnp.sqrt(H)
    w2 = jax.random.uniform(k2, (H, H), minval=-bound2, maxval=bound2, dtype=jnp.float32)

    # Pre-transpose weights so the kernel computes z @ W1^T and h @ W2^T row-major.
    w1_t = w1.T  # (D, H)
    w2_t = w2.T  # (H, H)

    out = attention_forward(z, w1_t, b1, w2_t)
    out = jax.block_until_ready(out)

    ref = reference_forward(z, w1_t, b1, w2_t)
    assert out.shape == (B, D)
    assert jnp.allclose(out, ref, atol=1e-3, rtol=1e-3), "mismatch vs reference"

    print("KERNEL_OK")
</pallas_src>

<mosaic_0001>
module attributes {stable_mosaic.version = 11 : i64} {
  func.func @attention_kernel(%arg0: i32, %arg1: memref<8x8x32xf32, #tpu.memory_space<vmem>>, %arg2: memref<32x32xf32, #tpu.memory_space<vmem>>, %arg3: memref<1x32xf32, #tpu.memory_space<vmem>>, %arg4: memref<32x32xf32, #tpu.memory_space<vmem>>, %arg5: memref<8x32xf32, #tpu.memory_space<vmem>>) attributes {dimension_semantics = [#tpu.dimension_semantics<parallel>], iteration_bounds = array<i64: 2>, scalar_prefetch = 0 : i64, scratch_operands = 0 : i64, tpu.core_type = #tpu.core_type<tc>, window_params = [{transform_indices = @transform_0, window_bounds = array<i64: 8, 8, 32>}, {pipeline_mode = #tpu.pipeline_mode<synchronous>, transform_indices = @transform_1, window_bounds = array<i64: 32, 32>}, {pipeline_mode = #tpu.pipeline_mode<synchronous>, transform_indices = @transform_2, window_bounds = array<i64: 1, 32>}, {pipeline_mode = #tpu.pipeline_mode<synchronous>, transform_indices = @transform_3, window_bounds = array<i64: 32, 32>}, {transform_indices = @transform_4, window_bounds = array<i64: 8, 32>}]} {
    %c0 = arith.constant 0 : index
    %c0_0 = arith.constant 0 : index
    %c0_1 = arith.constant 0 : index
    %0 = vector.load %arg1[%c0, %c0_0, %c0_1] : memref<8x8x32xf32, #tpu.memory_space<vmem>>, vector<8x8x32xf32>
    %1 = vector.shape_cast %0 : vector<8x8x32xf32> to vector<64x32xf32>
    %c0_2 = arith.constant 0 : index
    %c0_3 = arith.constant 0 : index
    %2 = vector.load %arg2[%c0_2, %c0_3] : memref<32x32xf32, #tpu.memory_space<vmem>>, vector<32x32xf32>
    %cst = arith.constant dense<0.000000e+00> : vector<64x32xf32>
    %3 = tpu.matmul %1, %2, %cst {dimension_numbers = #tpu.dot_dimension_numbers<[1], [0], [0], [1], [0, 0, 1, 1], [], []>, precision = #tpu.contract_precision<fp32>} : vector<64x32xf32>, vector<32x32xf32>, vector<64x32xf32> -> vector<64x32xf32>
    %c0_4 = arith.constant 0 : index
    %c0_5 = arith.constant 0 : index
    %4 = vector.load %arg3[%c0_4, %c0_5] : memref<1x32xf32, #tpu.memory_space<vmem>>, vector<1x32xf32>
    %5 = vector.broadcast %4 : vector<1x32xf32> to vector<64x32xf32>
    %6 = arith.addf %3, %5 : vector<64x32xf32>
    %7 = math.tanh %6 : vector<64x32xf32>
    %c0_6 = arith.constant 0 : index
    %c0_7 = arith.constant 0 : index
    %8 = vector.load %arg4[%c0_6, %c0_7] : memref<32x32xf32, #tpu.memory_space<vmem>>, vector<32x32xf32>
    %cst_8 = arith.constant dense<0.000000e+00> : vector<64x32xf32>
    %9 = tpu.matmul %7, %8, %cst_8 {dimension_numbers = #tpu.dot_dimension_numbers<[1], [0], [0], [1], [0, 0, 1, 1], [], []>, precision = #tpu.contract_precision<fp32>} : vector<64x32xf32>, vector<32x32xf32>, vector<64x32xf32> -> vector<64x32xf32>
    %10 = vector.shape_cast %9 : vector<64x32xf32> to vector<8x8x32xf32>
    %cst_9 = arith.constant dense<0xFF800000> : vector<8x32xf32>
    %11 = vector.multi_reduction <maximumf>, %10, %cst_9 [1] : vector<8x8x32xf32> to vector<8x32xf32>
    %12 = vector.shape_cast %11 : vector<8x32xf32> to vector<8x1x32xf32>
    %13 = vector.broadcast %12 : vector<8x1x32xf32> to vector<8x8x32xf32>
    %14 = arith.subf %10, %13 : vector<8x8x32xf32>
    %15 = math.exp %14 : vector<8x8x32xf32>
    %cst_10 = arith.constant dense<0.000000e+00> : vector<8x32xf32>
    %16 = vector.multi_reduction <add>, %15, %cst_10 [1] : vector<8x8x32xf32> to vector<8x32xf32>
    %17 = arith.mulf %15, %0 : vector<8x8x32xf32>
    %cst_11 = arith.constant dense<0.000000e+00> : vector<8x32xf32>
    %18 = vector.multi_reduction <add>, %17, %cst_11 [1] : vector<8x8x32xf32> to vector<8x32xf32>
    %19 = arith.divf %18, %16 : vector<8x32xf32>
    %c0_12 = arith.constant 0 : index
    %c0_13 = arith.constant 0 : index
    %20 = vector.load %arg5[%c0_12, %c0_13] : memref<8x32xf32, #tpu.memory_space<vmem>>, vector<8x32xf32>
    tpu.vector_store %arg5[%c0_12, %c0_13], %19 {strides = array<i32>} : memref<8x32xf32, #tpu.memory_space<vmem>>, vector<8x32xf32>,
    return
  }
  func.func @transform_0(%arg0: i32) -> (i32, i32, i32) {
    %c0_i32 = arith.constant 0 : i32
    %c0_i32_0 = arith.constant 0 : i32
    %c0_i32_1 = arith.constant 0 : i32
    return %arg0, %c0_i32, %c0_i32_0 : i32, i32, i32
  }
  func.func @transform_1(%arg0: i32) -> (i32, i32) {
    %c0_i32 = arith.constant 0 : i32
    %c0_i32_0 = arith.constant 0 : i32
    %c0_i32_1 = arith.constant 0 : i32
    return %c0_i32, %c0_i32_0 : i32, i32
  }
  func.func @transform_2(%arg0: i32) -> (i32, i32) {
    %c0_i32 = arith.constant 0 : i32
    %c0_i32_0 = arith.constant 0 : i32
    %c0_i32_1 = arith.constant 0 : i32
    return %c0_i32, %c0_i32_0 : i32, i32
  }
  func.func @transform_3(%arg0: i32) -> (i32, i32) {
    %c0_i32 = arith.constant 0 : i32
    %c0_i32_0 = arith.constant 0 : i32
    %c0_i32_1 = arith.constant 0 : i32
    return %c0_i32, %c0_i32_0 : i32, i32
  }
  func.func @transform_4(%arg0: i32) -> (i32, i32) {
    %c0_i32 = arith.constant 0 : i32
    %c0_i32_0 = arith.constant 0 : i32
    return %arg0, %c0_i32 : i32, i32
  }
}

</mosaic_0001>

<llo_original>
// kernel: tpu_custom_call.1
$region0: #{tpu_custom_call.1}
  #allocation0 [shape = 'u32[]', space=smem, size = 0x4, offset = 0x4, fixed_abs, tag = 'smem constant byte address 0x4 - core index']
  #allocation1 [shape = 'u32[144,128]{1,0:T(1,128)}', space=vmem, size = 0x12000, scoped, tag = 'internal scratch']
  %s0 = inlined_call_operand.hbm [shape: f32[16,8,32], index: 0, kind: input, shape index: {}]
  %s1 = inlined_call_operand.hbm [shape: f32[32,32], index: 1, kind: input, shape index: {}]
  %s2 = inlined_call_operand.vmem [shape: f32[1,32], index: 2, kind: input, shape index: {}]
  %s3 = inlined_call_operand.hbm [shape: f32[32,32], index: 3, kind: input, shape index: {}]
  %s4 = inlined_call_operand.hbm [shape: f32[16,32], index: 4, kind: output, shape index: {}]
  %s5 = sld [smem:[#allocation0]]
  $region61: #{tpu_custom_call.1} parent=0
    _
  %s7 = ssub.s32 1, %s5
  %s8 = scalar_select 0, %s7, %s5
  $region1: #{tpu_custom_call.1} parent=0
    #allocation2 [shape = 'u8[65536]{0}', space=vmem, size = 0x10000, scoped, tag = 'input window, operand 0']
    #allocation3 [shape = 's32[2]{0}', space=sflag, size = 0x8, scoped, tag = 'scoped memory for tpu_custom_call.1']
    #allocation4 [shape = 's32[2]{0}', space=sflag, size = 0x8, scoped, tag = 'scoped memory for tpu_custom_call.1']
    #allocation5 [shape = 'u8[16384]{0}', space=vmem, size = 0x4000, scoped, tag = 'input window, operand 1, single buffered']
    #allocation6 [shape = 's32[1]{0}', space=sflag, size = 0x4, scoped, tag = 'scoped memory for tpu_custom_call.1']
    #allocation7 [shape = 'u8[16384]{0}', space=vmem, size = 0x4000, scoped, tag = 'input window, operand 3, single buffered']
    #allocation8 [shape = 'u8[8192]{0}', space=vmem, size = 0x2000, scoped, tag = 'output window, operand 0']
    %9 = vsyncpa [#allocation3], 0
    %s10 = scalar_lea.sflag [#allocation3], 1
    %11 = vsyncpa %s10, 0
    %12 = vsyncpa [#allocation6], 0
    %13 = vsyncpa [#allocation4], 0
    %s14 = scalar_lea.sflag [#allocation4], 1
    %15 = vsyncpa %s14, 0
    loop: start=0, step=1, limit=4
    $region2: #{tpu_custom_call.1} parent=1 // loop_pre_header
      _
    $region3: #{tpu_custom_call.1} parent=1 // loop_header
      %s17 = sphi 0, %s21
      %p18 = scmp.ge.s32.totalorder %s17, 4
      %s27 = sphi 0, %s29
      %s30 = sphi 0, %s27
      %s31 = sphi 0, %s30
      %s47 = sphi 0, %s31
      %s51 = sphi 0, %s51
      %s53 = sphi 0, %s51
      %s54 = sphi 0, %s53
      %s68 = sphi 0, %s54
      %s72 = sphi 0, %s72
      %s74 = sphi 0, %s72
      %s75 = sphi 0, %s74
      %s89 = sphi 0, %s75
      %s93 = sphi 0, %s93
      %s95 = sphi 0, %s93
      %s96 = sphi 0, %s95
      %s110 = sphi 0, %s96
      %s116 = sphi 0, %s118
      %s119 = sphi 0, %s116
      %s120 = sphi 0, %s119
      %s136 = sphi 0, %s120
    $region4: #{tpu_custom_call.1} parent=1 // loop_header_branch
      %20 = sbr.rel (%p18) target = $region8
    $region5: #{tpu_custom_call.1} parent=1 // loop_body
      %s22 = ssub.s32 %s17, 1
      %s23 = ssub.s32 %s17, 2
      %s24 = sadd.s32 %s17, 1
      %s25 = ssub.s32 %s17, %s24
      %p26 = scmp.eq.s32.totalorder %s25, 0
      %s28 = sadd.s32 %s27, 1
      %s29 = scalar_select %p26, %s27, %s28
      %p32 = pneg %p26
      %p33 = scmp.eq.s32.totalorder %s17, 1
      %p34 = por %p32, %p33
      %p35 = scmp.ne.s32.totalorder %s27, %s30
      %p36 = scmp.eq.s32.totalorder %s17, 0
      %p37 = por %p35, %p36
      %p38 = scmp.ne.s32.totalorder %s27, %s30
      %p39 = scmp.eq.s32.totalorder %s22, 1
      %p40 = por %p38, %p39
      %p41 = scmp.ne.s32.totalorder %s30, %s31
      %p42 = scmp.eq.s32.totalorder %s22, 0
      %p43 = por %p41, %p42
      %p44 = scmp.ne.s32.totalorder %s30, %s31
      %p45 = scmp.eq.s32.totalorder %s23, 1
      %p46 = por %p44, %p45
      %p48 = scmp.ne.s32.totalorder %s31, %s47
      %p49 = scmp.eq.s32.totalorder %s23, 0
      %p50 = por %p48, %p49
      %s52 = sadd.s32 %s51, 1
      %p55 = scmp.eq.s32.totalorder %s17, 1
      %p56 = scmp.ne.s32.totalorder %s51, %s53
      %p57 = scmp.eq.s32.totalorder %s17, 0
      %p58 = por %p56, %p57
      %p59 = scmp.ne.s32.totalorder %s51, %s53
      %p60 = scmp.eq.s32.totalorder %s22, 1
      %p61 = por %p59, %p60
      %p62 = scmp.ne.s32.totalorder %s53, %s54
      %p63 = scmp.eq.s32.totalorder %s22, 0
      %p64 = por %p62, %p63
      %p65 = scmp.ne.s32.totalorder %s53, %s54
      %p66 = scmp.eq.s32.totalorder %s23, 1
      %p67 = por %p65, %p66
      %p69 = scmp.ne.s32.totalorder %s54, %s68
      %p70 = scmp.eq.s32.totalorder %s23, 0
      %p71 = por %p69, %p70
      %s73 = sadd.s32 %s72, 1
      %p76 = scmp.eq.s32.totalorder %s17, 1
      %p77 = scmp.ne.s32.totalorder %s72, %s74
      %p78 = scmp.eq.s32.totalorder %s17, 0
      %p79 = por %p77, %p78
      %p80 = scmp.ne.s32.totalorder %s72, %s74
      %p81 = scmp.eq.s32.totalorder %s22, 1
      %p82 = por %p80, %p81
      %p83 = scmp.ne.s32.totalorder %s74, %s75
      %p84 = scmp.eq.s32.totalorder %s22, 0
      %p85 = por %p83, %p84
      %p86 = scmp.ne.s32.totalorder %s74, %s75
      %p87 = scmp.eq.s32.totalorder %s23, 1
      %p88 = por %p86, %p87
      %p90 = scmp.ne.s32.totalorder %s75, %s89
      %p91 = scmp.eq.s32.totalorder %s23, 0
      %p92 = por %p90, %p91
      %s94 = sadd.s32 %s93, 1
      %p97 = scmp.eq.s32.totalorder %s17, 1
      %p98 = scmp.ne.s32.totalorder %s93, %s95
      %p99 = scmp.eq.s32.totalorder %s17, 0
      %p100 = por %p98, %p99
      %p101 = scmp.ne.s32.totalorder %s93, %s95
      %p102 = scmp.eq.s32.totalorder %s22, 1
      %p103 = por %p101, %p102
      %p104 = scmp.ne.s32.totalorder %s95, %s96
      %p105 = scmp.eq.s32.totalorder %s22, 0
      %p106 = por %p104, %p105
      %p107 = scmp.ne.s32.totalorder %s95, %s96
      %p108 = scmp.eq.s32.totalorder %s23, 1
      %p109 = por %p107, %p108
      %p111 = scmp.ne.s32.totalorder %s96, %s110
      %p112 = scmp.eq.s32.totalorder %s23, 0
      %p113 = por %p111, %p112
      %s114 = ssub.s32 %s17, %s24
      %p115 = scmp.eq.s32.totalorder %s114, 0
      %s117 = sadd.s32 %s116, 1
      %s118 = scalar_select %p115, %s116, %s117
      %p121 = pneg %p115
      %p122 = scmp.eq.s32.totalorder %s17, 1
      %p123 = por %p121, %p122
      %p124 = scmp.ne.s32.totalorder %s116, %s119
      %p125 = scmp.eq.s32.totalorder %s17, 0
      %p126 = por %p124, %p125
      %p127 = scmp.ne.s32.totalorder %s116, %s119
      %p128 = scmp.eq.s32.totalorder %s22, 1
      %p129 = por %p127, %p128
      %p130 = scmp.ne.s32.totalorder %s119, %s120
      %p131 = scmp.eq.s32.totalorder %s22, 0
      %p132 = por %p130, %p131
      %p133 = scmp.ne.s32.totalorder %s119, %s120
      %p134 = scmp.eq.s32.totalorder %s23, 1
      %p135 = por %p133, %p134
      %p137 = scmp.ne.s32.totalorder %s120, %s136
      %p138 = scmp.eq.s32.totalorder %s23, 0
      %p139 = por %p137, %p138
      %p140 = scmp.le.s32.totalorder 1, %s17
      %p141 = scmp.lt.s32.totalorder %s17, 3
      %p142 = pnand %p140, %p141
      %p143 = pneg %p142
      // Predicated region
      $region9: #{tpu_custom_call.1} parent=5 // pred_check
        _
      $region10: #{tpu_custom_call.1} parent=5 // pred_check_branch
        %145 = sbr.rel (%p142) target = $region12
      $region11: #{tpu_custom_call.1} parent=5 // pred_region
        %s146 = ssub.s32 %s17, 1
        // Predicated region
        $region13: #{tpu_custom_call.1} parent=11 // pred_check
          %p147 = pneg %p64
        $region14: #{tpu_custom_call.1} parent=11 // pred_check_branch
          %149 = sbr.rel (%p147) target = $region16
        $region15: #{tpu_custom_call.1} parent=11 // pred_region
          %s151 = ssub.s32 512, 512
          %152 = vsyncadd [#allocation6], %s151
          %s153 = sshll.u32 [#allocation5], 4
          %s154 = int_to_ptr.vmem [resolvable:$true] %s153
          %159 = dma.hbm_to_vmem [thread:$0]  %s1, 512, %s154, [#allocation6], 128, 128, 8
        $region16: #{tpu_custom_call.1} parent=11 // pred_fallthru
          _
        // Predicated region
        $region17: #{tpu_custom_call.1} parent=11 // pred_check
          %p160 = pneg %p85
        $region18: #{tpu_custom_call.1} parent=11 // pred_check_branch
          %162 = sbr.rel (%p160) target = $region20
        $region19: #{tpu_custom_call.1} parent=11 // pred_region
          _
        $region20: #{tpu_custom_call.1} parent=11 // pred_fallthru
          _
        // Predicated region
        $region21: #{tpu_custom_call.1} parent=11 // pred_check
          %p163 = pneg %p106
        $region22: #{tpu_custom_call.1} parent=11 // pred_check_branch
          %165 = sbr.rel (%p163) target = $region24
        $region23: #{tpu_custom_call.1} parent=11 // pred_region
          %s167 = ssub.s32 512, 512
          %168 = vsyncadd [#allocation6], %s167
          %s169 = sshll.u32 [#allocation7], 4
          %s170 = int_to_ptr.vmem [resolvable:$true] %s169
          %175 = dma.hbm_to_vmem [thread:$0]  %s3, 512, %s170, [#allocation6], 128, 128, 8
        $region24: #{tpu_custom_call.1} parent=11 // pred_fallthru
          _
      $region12: #{tpu_custom_call.1} parent=5 // pred_fallthru
        _
      %p176 = scmp.lt.s32.totalorder %s17, 2
      // Predicated region
      $region25: #{tpu_custom_call.1} parent=5 // pred_check
        %p177 = pneg %p176
      $region26: #{tpu_custom_call.1} parent=5 // pred_check_branch
        %179 = sbr.rel (%p177) target = $region28
      $region27: #{tpu_custom_call.1} parent=5 // pred_region
        // Predicated region
        $region29: #{tpu_custom_call.1} parent=27 // pred_check
          %p180 = pneg %p37
        $region30: #{tpu_custom_call.1} parent=27 // pred_check_branch
          %182 = sbr.rel (%p180) target = $region32
        $region31: #{tpu_custom_call.1} parent=27 // pred_region
          %s183 = sand.u32 %s27, 1
          %s184 = scalar_lea.sflag [#allocation3], %s183
          %s185 = sand.u32 %s27, 1
          %s186 = smul.addr %s185, 64
          %s187 = scalar_lea.vmem [#allocation2], %s186
          %s188 = smul.u32 8, %s17
          %s190 = ssub.s32 1024, 1024
          %191 = vsyncadd %s184, %s190
          %s192 = smul.addr %s188, 128
          %s193 = scalar_lea.hbm %s0, %s192
          %s194 = sshll.u32 %s187, 4
          %s195 = int_to_ptr.vmem [resolvable:$true] %s194
          %200 = dma.hbm_to_vmem [thread:$0]  %s193, 1024, %s195, %s184, 128, 128, 8
        $region32: #{tpu_custom_call.1} parent=27 // pred_fallthru
          _
      $region28: #{tpu_custom_call.1} parent=5 // pred_fallthru
        _
      %p201 = scmp.le.s32.totalorder 1, %s17
      %p202 = scmp.lt.s32.totalorder %s17, 3
      %p203 = pnand %p201, %p202
      %p204 = pneg %p203
      // Predicated region
      $region33: #{tpu_custom_call.1} parent=5 // pred_check
        _
      $region34: #{tpu_custom_call.1} parent=5 // pred_check_branch
        %206 = sbr.rel (%p203) target = $region36
      $region35: #{tpu_custom_call.1} parent=5 // pred_region
        %s207 = ssub.s32 %s17, 1
        %s208 = sand.u32 %s30, 1
        %s209 = scalar_lea.sflag [#allocation3], %s208
        %s210 = sand.u32 %s30, 1
        %s211 = smul.addr %s210, 64
        %s212 = scalar_lea.vmem [#allocation2], %s211
        // Predicated region
        $region37: #{tpu_custom_call.1} parent=35 // pred_check
          %p213 = pneg %p43
        $region38: #{tpu_custom_call.1} parent=35 // pred_check_branch
          %215 = sbr.rel (%p213) target = $region40
        $region39: #{tpu_custom_call.1} parent=35 // pred_region
          %216 = dma.done %s209, 1024
        $region40: #{tpu_custom_call.1} parent=35 // pred_fallthru
          _
        // Predicated region
        $region41: #{tpu_custom_call.1} parent=35 // pred_check
          %p217 = pneg %p64
        $region42: #{tpu_custom_call.1} parent=35 // pred_check_branch
          %219 = sbr.rel (%p217) target = $region44
        $region43: #{tpu_custom_call.1} parent=35 // pred_region
          %220 = dma.done [#allocation6], 512
        $region44: #{tpu_custom_call.1} parent=35 // pred_fallthru
          _
        // Predicated region
        $region45: #{tpu_custom_call.1} parent=35 // pred_check
          %p221 = pneg %p106
        $region46: #{tpu_custom_call.1} parent=35 // pred_check_branch
          %223 = sbr.rel (%p221) target = $region48
        $region47: #{tpu_custom_call.1} parent=35 // pred_region
          %224 = dma.done [#allocation6], 512
        $region48: #{tpu_custom_call.1} parent=35 // pred_fallthru
          _
        %s225 = sand.u32 %s30, 1
        %s226 = scalar_lea.sflag [#allocation3], %s225
        %s227 = sand.u32 %s30, 1
        %s228 = smul.addr %s227, 64
        %s229 = scalar_lea.vmem [#allocation2], %s228
        %p230 = pneg %p43
        %p231 = pneg %p40
        %p232 = pneg %p64
        %p233 = pneg %p61
        %p234 = pneg %p85
        %p235 = pneg %p82
        %p236 = pneg %p106
        %p237 = pneg %p103
        %p238 = pneg %p132
        %p239 = pneg %p129
        %s240 = sand.u32 %s119, 1
        %s241 = scalar_lea.sflag [#allocation4], %s240
        %s242 = sand.u32 %s119, 1
        %s243 = smul.addr %s242, 8
        %s244 = scalar_lea.vmem [#allocation8], %s243
        %s245 = smul.u32 8, %s22
        %v246 = vld [vmem:[%s212] sm:$0xff]
        %v247 = vld [vmem:[%s212 + $0x8] sm:$0xff]
        %v248 = vld [vmem:[%s212 + $0x10] sm:$0xff]
        %v249 = vld [vmem:[%s212 + $0x18] sm:$0xff]
        %v250 = vld [vmem:[%s212 + $0x20] sm:$0xff]
        %v251 = vld [vmem:[%s212 + $0x28] sm:$0xff]
        %v252 = vld [vmem:[%s212 + $0x30] sm:$0xff]
        %v253 = vld [vmem:[%s212 + $0x38] sm:$0xff]
        %v254 = vld [vmem:[#allocation5] sm:$0xff]
        %v255 = vld [vmem:[#allocation5 + $0x8] sm:$0xff]
        %v256 = vld [vmem:[#allocation5 + $0x10] sm:$0xff]
        %v257 = vld [vmem:[#allocation5 + $0x18] sm:$0xff]
        %v258 = vld [vmem:[%s2] sm:$0x1]
        %v260 = vlaneseq
        %v261 = vshrl.u32 %v260, 7
        %v262 = vsub.s32 0, %v261
        %v263 = vrot.slane %v258, %v262
        %vm265 = vcmask 261120
        %v267 = vsel %vm265, %v246, 0
        %v270 = vsel %vm265, %v247, 0
        %v273 = vsel %vm265, %v248, 0
        %v276 = vsel %vm265, %v249, 0
        %v279 = vsel %vm265, %v250, 0
        %v282 = vsel %vm265, %v251, 0
        %v285 = vsel %vm265, %v252, 0
        %v288 = vsel %vm265, %v253, 0
        %290 = vmatprep.subr.mxu0 0.0
        %291 = vmatpush1.msra.mxu0 0.0
        %292 = vmatprep.subr.mxu0 0.0
        %293 = vmatpush1.msra.mxu0 0.0
        %294 = vmatprep.subr.mxu0 0.0
        %295 = vmatpush1.msra.mxu0 0.0
        %296 = vmatprep.subr.mxu0 0.0
        %297 = vmatpush1.msra.mxu0 0.0
        %298 = vmatprep.subr.mxu0 0.0
        %299 = vmatpush1.msra.mxu0 0.0
        %300 = vmatprep.subr.mxu0 0.0
        %301 = vmatpush1.msra.mxu0 0.0
        %302 = vmatprep.subr.mxu0 0.0
        %303 = vmatpush1.msra.mxu0 0.0
        %304 = vmatprep.subr.mxu0 0.0
        %305 = vmatpush1.msra.mxu0 0.0
        %306 = vmatprep.subr.mxu0 0.0
        %307 = vmatpush1.msra.mxu0 0.0
        %308 = vmatprep.subr.mxu0 0.0
        %309 = vmatpush1.msra.mxu0 0.0
        %310 = vmatprep.subr.mxu0 0.0
        %311 = vmatpush1.msra.mxu0 0.0
        %312 = vmatprep.subr.mxu0 0.0
        %313 = vmatpush1.msra.mxu0 0.0
        %314 = vmatprep.subr.mxu0 0.0
        %v315 = vand.u32 %v257, 4294901760
        %316 = vmatpush1.msra.mxu0 %v315
        %317 = vmatprep.subr.mxu0 0.0
        %v318 = vand.u32 %v256, 4294901760
        %319 = vmatpush1.msra.mxu0 %v318
        %320 = vmatprep.subr.mxu0 0.0
        %v321 = vand.u32 %v255, 4294901760
        %322 = vmatpush1.msra.mxu0 %v321
        %323 = vmatprep.subr.mxu0 0.0
        %v324 = vand.u32 %v254, 4294901760
        %325 = vmatpush1.msra.mxu0 %v324
        %326 = vmatprep.subr.mxu0 0.0
        %327 = vmatpush2.msra.mxu0 0.0
        %328 = vmatprep.subr.mxu0 0.0
        %329 = vmatpush2.msra.mxu0 0.0
        %330 = vmatprep.subr.mxu0 0.0
        %331 = vmatpush2.msra.mxu0 0.0
        %332 = vmatprep.subr.mxu0 0.0
        %333 = vmatpush2.msra.mxu0 0.0
        %334 = vmatprep.subr.mxu0 0.0
        %335 = vmatpush2.msra.mxu0 0.0
        %336 = vmatprep.subr.mxu0 0.0
        %337 = vmatpush2.msra.mxu0 0.0
        %338 = vmatprep.subr.mxu0 0.0
        %339 = vmatpush2.msra.mxu0 0.0
        %340 = vmatprep.subr.mxu0 0.0
        %341 = vmatpush2.msra.mxu0 0.0
        %342 = vmatprep.subr.mxu0 0.0
        %343 = vmatpush2.msra.mxu0 0.0
        %344 = vmatprep.subr.mxu0 0.0
        %345 = vmatpush2.msra.mxu0 0.0
        %346 = vmatprep.subr.mxu0 0.0
        %347 = vmatpush2.msra.mxu0 0.0
        %348 = vmatprep.subr.mxu0 0.0
        %349 = vmatpush2.msra.mxu0 0.0
        %350 = vmatprep.subr.mxu0 0.0
        %351 = vmatpush2.msra.mxu0 0.0
        %352 = vmatprep.subr.mxu0 0.0
        %353 = vmatpush2.msra.mxu0 0.0
        %354 = vmatprep.subr.mxu0 0.0
        %355 = vmatpush2.msra.mxu0 0.0
        %356 = vmatprep.subr.mxu0 0.0
        %357 = vmatpush2.msra.mxu0 0.0
        %358 = vmatprep.mubr.f32.mxu0 0.0
        %v359 = vand.u32 %v267, 4294901760
        %v360 = vsub.f32 %v267, %v359
        %v361 = vand.u32 %v360, 4294901760
        %v362 = vsub.f32 %v360, %v361
        %v363 = vand.u32 %v362, 4294901760
        %364 = vmatmul.mubr.f32.gmra.mxu0 %v363
        %v365 = vpop.f32.mrf.mxu0
        %v366 = vadd.f32 %v263, %v365
        %v367 = vpop.f32.mrf.mxu0
        %368 = vmatprep.mubr.f32.mxu0 0.0
        %v369 = vand.u32 %v270, 4294901760
        %v370 = vsub.f32 %v270, %v369
        %v371 = vand.u32 %v370, 4294901760
        %v372 = vsub.f32 %v370, %v371
        %v373 = vand.u32 %v372, 4294901760
        %374 = vmatmul.mubr.f32.gmra.mxu0 %v373
        %v375 = vpop.f32.mrf.mxu0
        %v376 = vadd.f32 %v263, %v375
        %v377 = vpop.f32.mrf.mxu0
        %378 = vmatprep.mubr.f32.mxu0 0.0
        %v379 = vand.u32 %v273, 4294901760
        %v380 = vsub.f32 %v273, %v379
        %v381 = vand.u32 %v380, 4294901760
        %v382 = vsub.f32 %v380, %v381
        %v383 = vand.u32 %v382, 4294901760
        %384 = vmatmul.mubr.f32.gmra.mxu0 %v383
        %v385 = vpop.f32.mrf.mxu0
        %v386 = vadd.f32 %v263, %v385
        %v387 = vpop.f32.mrf.mxu0
        %388 = vmatprep.mubr.f32.mxu0 0.0
        %v389 = vand.u32 %v276, 4294901760
        %v390 = vsub.f32 %v276, %v389
        %v391 = vand.u32 %v390, 4294901760
        %v392 = vsub.f32 %v390, %v391
        %v393 = vand.u32 %v392, 4294901760
        %394 = vmatmul.mubr.f32.gmra.mxu0 %v393
        %v395 = vpop.f32.mrf.mxu0
        %v396 = vadd.f32 %v263, %v395
        %v397 = vpop.f32.mrf.mxu0
        %398 = vmatprep.mubr.f32.mxu0 0.0
        %v399 = vand.u32 %v279, 4294901760
        %v400 = vsub.f32 %v279, %v399
        %v401 = vand.u32 %v400, 4294901760
        %v402 = vsub.f32 %v400, %v401
        %v403 = vand.u32 %v402, 4294901760
        %404 = vmatmul.mubr.f32.gmra.mxu0 %v403
        %v405 = vpop.f32.mrf.mxu0
        %v406 = vadd.f32 %v263, %v405
        %v407 = vpop.f32.mrf.mxu0
        %408 = vmatprep.mubr.f32.mxu0 0.0
        %v409 = vand.u32 %v282, 4294901760
        %v410 = vsub.f32 %v282, %v409
        %v411 = vand.u32 %v410, 4294901760
        %v412 = vsub.f32 %v410, %v411
        %v413 = vand.u32 %v412, 4294901760
        %414 = vmatmul.mubr.f32.gmra.mxu0 %v413
        %v415 = vpop.f32.mrf.mxu0
        %v416 = vadd.f32 %v263, %v415
        %v417 = vpop.f32.mrf.mxu0
        %418 = vmatprep.mubr.f32.mxu0 0.0
        %v419 = vand.u32 %v285, 4294901760
        %v420 = vsub.f32 %v285, %v419
        %v421 = vand.u32 %v420, 4294901760
        %v422 = vsub.f32 %v420, %v421
        %v423 = vand.u32 %v422, 4294901760
        %424 = vmatmul.mubr.f32.gmra.mxu0 %v423
        %v425 = vpop.f32.mrf.mxu0
        %v426 = vadd.f32 %v263, %v425
        %v427 = vpop.f32.mrf.mxu0
        %428 = vmatprep.mubr.f32.mxu0 0.0
        %v429 = vand.u32 %v288, 4294901760
        %v430 = vsub.f32 %v288, %v429
        %v431 = vand.u32 %v430, 4294901760
        %v432 = vsub.f32 %v430, %v431
        %v433 = vand.u32 %v432, 4294901760
        %434 = vmatmul.mubr.f32.gmra.mxu0 %v433
        %v435 = vpop.f32.mrf.mxu0
        %v436 = vadd.f32 %v263, %v435
        %v437 = vpop.f32.mrf.mxu0
        %438 = vdwg.mxu0
        %439 = vmatprep.subr.mxu0 0.0
        %440 = vmatpush1.msra.mxu0 0.0
        %441 = vmatprep.subr.mxu0 0.0
        %442 = vmatpush1.msra.mxu0 0.0
        %443 = vmatprep.subr.mxu0 0.0
        %444 = vmatpush1.msra.mxu0 0.0
        %445 = vmatprep.subr.mxu0 0.0
        %446 = vmatpush1.msra.mxu0 0.0
        %447 = vmatprep.subr.mxu0 0.0
        %448 = vmatpush1.msra.mxu0 0.0
        %449 = vmatprep.subr.mxu0 0.0
        %450 = vmatpush1.msra.mxu0 0.0
        %451 = vmatprep.subr.mxu0 0.0
        %452 = vmatpush1.msra.mxu0 0.0
        %453 = vmatprep.subr.mxu0 0.0
        %454 = vmatpush1.msra.mxu0 0.0
        %455 = vmatprep.subr.mxu0 0.0
        %456 = vmatpush1.msra.mxu0 0.0
        %457 = vmatprep.subr.mxu0 0.0
        %458 = vmatpush1.msra.mxu0 0.0
        %459 = vmatprep.subr.mxu0 0.0
        %460 = vmatpush1.msra.mxu0 0.0
        %461 = vmatprep.subr.mxu0 0.0
        %462 = vmatpush1.msra.mxu0 0.0
        %463 = vmatprep.subr.mxu0 0.0
        %v464 = vand.u32 %v257, 4294901760
        %v465 = vsub.f32 %v257, %v464
        %v466 = vand.u32 %v465, 4294901760
        %v467 = vsub.f32 %v465, %v466
        %v468 = vand.u32 %v467, 4294901760
        %469 = vmatpush1.msra.mxu0 %v468
        %470 = vmatprep.subr.mxu0 0.0
        %v471 = vand.u32 %v256, 4294901760
        %v472 = vsub.f32 %v256, %v471
        %v473 = vand.u32 %v472, 4294901760
        %v474 = vsub.f32 %v472, %v473
        %v475 = vand.u32 %v474, 4294901760
        %476 = vmatpush1.msra.mxu0 %v475
        %477 = vmatprep.subr.mxu0 0.0
        %v478 = vand.u32 %v255, 4294901760
        %v479 = vsub.f32 %v255, %v478
        %v480 = vand.u32 %v479, 4294901760
        %v481 = vsub.f32 %v479, %v480
        %v482 = vand.u32 %v481, 4294901760
        %483 = vmatpush1.msra.mxu0 %v482
        %484 = vmatprep.subr.mxu0 0.0
        %v485 = vand.u32 %v254, 4294901760
        %v486 = vsub.f32 %v254, %v485
        %v487 = vand.u32 %v486, 4294901760
        %v488 = vsub.f32 %v486, %v487
        %v489 = vand.u32 %v488, 4294901760
        %490 = vmatpush1.msra.mxu0 %v489
        %491 = vmatprep.subr.mxu0 0.0
        %492 = vmatpush2.msra.mxu0 0.0
        %493 = vmatprep.subr.mxu0 0.0
        %494 = vmatpush2.msra.mxu0 0.0
        %495 = vmatprep.subr.mxu0 0.0
        %496 = vmatpush2.msra.mxu0 0.0
        %497 = vmatprep.subr.mxu0 0.0
        %498 = vmatpush2.msra.mxu0 0.0
        %499 = vmatprep.subr.mxu0 0.0
        %500 = vmatpush2.msra.mxu0 0.0
        %501 = vmatprep.subr.mxu0 0.0
        %502 = vmatpush2.msra.mxu0 0.0
        %503 = vmatprep.subr.mxu0 0.0
        %504 = vmatpush2.msra.mxu0 0.0
        %505 = vmatprep.subr.mxu0 0.0
        %506 = vmatpush2.msra.mxu0 0.0
        %507 = vmatprep.subr.mxu0 0.0
        %508 = vmatpush2.msra.mxu0 0.0
        %509 = vmatprep.subr.mxu0 0.0
        %510 = vmatpush2.msra.mxu0 0.0
        %511 = vmatprep.subr.mxu0 0.0
        %512 = vmatpush2.msra.mxu0 0.0
        %513 = vmatprep.subr.mxu0 0.0
        %514 = vmatpush2.msra.mxu0 0.0
        %515 = vmatprep.subr.mxu0 0.0
        %516 = vmatpush2.msra.mxu0 0.0
        %517 = vmatprep.subr.mxu0 0.0
        %518 = vmatpush2.msra.mxu0 0.0
        %519 = vmatprep.subr.mxu0 0.0
        %520 = vmatpush2.msra.mxu0 0.0
        %521 = vmatprep.subr.mxu0 0.0
        %522 = vmatpush2.msra.mxu0 0.0
        %523 = vmatprep.mubr.f32.mxu0 0.0
        %v524 = vand.u32 %v267, 4294901760
        %525 = vmatmul.mubr.f32.gmra.mxu0 %v524
        %v526 = vpop.f32.mrf.mxu0
        %v527 = vadd.f32 %v366, %v526
        %v528 = vpop.f32.mrf.mxu0
        %529 = vmatprep.mubr.f32.mxu0 0.0
        %v530 = vand.u32 %v270, 4294901760
        %531 = vmatmul.mubr.f32.gmra.mxu0 %v530
        %v532 = vpop.f32.mrf.mxu0
        %v533 = vadd.f32 %v376, %v532
        %v534 = vpop.f32.mrf.mxu0
        %535 = vmatprep.mubr.f32.mxu0 0.0
        %v536 = vand.u32 %v273, 4294901760
        %537 = vmatmul.mubr.f32.gmra.mxu0 %v536
        %v538 = vpop.f32.mrf.mxu0
        %v539 = vadd.f32 %v386, %v538
        %v540 = vpop.f32.mrf.mxu0
        %541 = vmatprep.mubr.f32.mxu0 0.0
        %v542 = vand.u32 %v276, 4294901760
        %543 = vmatmul.mubr.f32.gmra.mxu0 %v542
        %v544 = vpop.f32.mrf.mxu0
        %v545 = vadd.f32 %v396, %v544
        %v546 = vpop.f32.mrf.mxu0
        %547 = vmatprep.mubr.f32.mxu0 0.0
        %v548 = vand.u32 %v279, 4294901760
        %549 = vmatmul.mubr.f32.gmra.mxu0 %v548
        %v550 = vpop.f32.mrf.mxu0
        %v551 = vadd.f32 %v406, %v550
        %v552 = vpop.f32.mrf.mxu0
        %553 = vmatprep.mubr.f32.mxu0 0.0
        %v554 = vand.u32 %v282, 4294901760
        %555 = vmatmul.mubr.f32.gmra.mxu0 %v554
        %v556 = vpop.f32.mrf.mxu0
        %v557 = vadd.f32 %v416, %v556
        %v558 = vpop.f32.mrf.mxu0
        %559 = vmatprep.mubr.f32.mxu0 0.0
        %v560 = vand.u32 %v285, 4294901760
        %561 = vmatmul.mubr.f32.gmra.mxu0 %v560
        %v562 = vpop.f32.mrf.mxu0
        %v563 = vadd.f32 %v426, %v562
        %v564 = vpop.f32.mrf.mxu0
        %565 = vmatprep.mubr.f32.mxu0 0.0
        %v566 = vand.u32 %v288, 4294901760
        %567 = vmatmul.mubr.f32.gmra.mxu0 %v566
        %v568 = vpop.f32.mrf.mxu0
        %v569 = vadd.f32 %v436, %v568
        %v570 = vpop.f32.mrf.mxu0
        %571 = vdwg.mxu0
        %572 = vmatprep.subr.mxu0 0.0
        %573 = vmatpush1.msra.mxu0 0.0
        %574 = vmatprep.subr.mxu0 0.0
        %575 = vmatpush1.msra.mxu0 0.0
        %576 = vmatprep.subr.mxu0 0.0
        %577 = vmatpush1.msra.mxu0 0.0
        %578 = vmatprep.subr.mxu0 0.0
        %579 = vmatpush1.msra.mxu0 0.0
        %580 = vmatprep.subr.mxu0 0.0
        %581 = vmatpush1.msra.mxu0 0.0
        %582 = vmatprep.subr.mxu0 0.0
        %583 = vmatpush1.msra.mxu0 0.0
        %584 = vmatprep.subr.mxu0 0.0
        %585 = vmatpush1.msra.mxu0 0.0
        %586 = vmatprep.subr.mxu0 0.0
        %587 = vmatpush1.msra.mxu0 0.0
        %588 = vmatprep.subr.mxu0 0.0
        %589 = vmatpush1.msra.mxu0 0.0
        %590 = vmatprep.subr.mxu0 0.0
        %591 = vmatpush1.msra.mxu0 0.0
        %592 = vmatprep.subr.mxu0 0.0
        %593 = vmatpush1.msra.mxu0 0.0
        %594 = vmatprep.subr.mxu0 0.0
        %595 = vmatpush1.msra.mxu0 0.0
        %596 = vmatprep.subr.mxu0 0.0
        %v597 = vand.u32 %v257, 4294901760
        %v598 = vsub.f32 %v257, %v597
        %599 = vmatpush1.msra.mxu0 %v598
        %600 = vmatprep.subr.mxu0 0.0
        %v601 = vand.u32 %v256, 4294901760
        %v602 = vsub.f32 %v256, %v601
        %603 = vmatpush1.msra.mxu0 %v602
        %604 = vmatprep.subr.mxu0 0.0
        %v605 = vand.u32 %v255, 4294901760
        %v606 = vsub.f32 %v255, %v605
        %607 = vmatpush1.msra.mxu0 %v606
        %608 = vmatprep.subr.mxu0 0.0
        %v609 = vand.u32 %v254, 4294901760
        %v610 = vsub.f32 %v254, %v609
        %611 = vmatpush1.msra.mxu0 %v610
        %612 = vmatprep.subr.mxu0 0.0
        %613 = vmatpush2.msra.mxu0 0.0
        %614 = vmatprep.subr.mxu0 0.0
        %615 = vmatpush2.msra.mxu0 0.0
        %616 = vmatprep.subr.mxu0 0.0
        %617 = vmatpush2.msra.mxu0 0.0
        %618 = vmatprep.subr.mxu0 0.0
        %619 = vmatpush2.msra.mxu0 0.0
        %620 = vmatprep.subr.mxu0 0.0
        %621 = vmatpush2.msra.mxu0 0.0
        %622 = vmatprep.subr.mxu0 0.0
        %623 = vmatpush2.msra.mxu0 0.0
        %624 = vmatprep.subr.mxu0 0.0
        %625 = vmatpush2.msra.mxu0 0.0
        %626 = vmatprep.subr.mxu0 0.0
        %627 = vmatpush2.msra.mxu0 0.0
        %628 = vmatprep.subr.mxu0 0.0
        %629 = vmatpush2.msra.mxu0 0.0
        %630 = vmatprep.subr.mxu0 0.0
        %631 = vmatpush2.msra.mxu0 0.0
        %632 = vmatprep.subr.mxu0 0.0
        %633 = vmatpush2.msra.mxu0 0.0
        %634 = vmatprep.subr.mxu0 0.0
        %635 = vmatpush2.msra.mxu0 0.0
        %636 = vmatprep.subr.mxu0 0.0
        %637 = vmatpush2.msra.mxu0 0.0
        %638 = vmatprep.subr.mxu0 0.0
        %639 = vmatpush2.msra.mxu0 0.0
        %640 = vmatprep.subr.mxu0 0.0
        %641 = vmatpush2.msra.mxu0 0.0
        %642 = vmatprep.subr.mxu0 0.0
        %643 = vmatpush2.msra.mxu0 0.0
        %644 = vmatprep.mubr.f32.mxu0 0.0
        %v645 = vand.u32 %v267, 4294901760
        %v646 = vsub.f32 %v267, %v645
        %647 = vmatmul.mubr.f32.gmra.mxu0 %v646
        %v648 = vpop.f32.mrf.mxu0
        %v649 = vadd.f32 %v527, %v648
        %v650 = vpop.f32.mrf.mxu0
        %651 = vmatprep.mubr.f32.mxu0 0.0
        %v652 = vand.u32 %v270, 4294901760
        %v653 = vsub.f32 %v270, %v652
        %654 = vmatmul.mubr.f32.gmra.mxu0 %v653
        %v655 = vpop.f32.mrf.mxu0
        %v656 = vadd.f32 %v533, %v655
        %v657 = vpop.f32.mrf.mxu0
        %658 = vmatprep.mubr.f32.mxu0 0.0
        %v659 = vand.u32 %v273, 4294901760
        %v660 = vsub.f32 %v273, %v659
        %661 = vmatmul.mubr.f32.gmra.mxu0 %v660
        %v662 = vpop.f32.mrf.mxu0
        %v663 = vadd.f32 %v539, %v662
        %v664 = vpop.f32.mrf.mxu0
        %665 = vmatprep.mubr.f32.mxu0 0.0
        %v666 = vand.u32 %v276, 4294901760
        %v667 = vsub.f32 %v276, %v666
        %668 = vmatmul.mubr.f32.gmra.mxu0 %v667
        %v669 = vpop.f32.mrf.mxu0
        %v670 = vadd.f32 %v545, %v669
        %v671 = vpop.f32.mrf.mxu0
        %672 = vmatprep.mubr.f32.mxu0 0.0
        %v673 = vand.u32 %v279, 4294901760
        %v674 = vsub.f32 %v279, %v673
        %675 = vmatmul.mubr.f32.gmra.mxu0 %v674
        %v676 = vpop.f32.mrf.mxu0
        %v677 = vadd.f32 %v551, %v676
        %v678 = vpop.f32.mrf.mxu0
        %679 = vmatprep.mubr.f32.mxu0 0.0
        %v680 = vand.u32 %v282, 4294901760
        %v681 = vsub.f32 %v282, %v680
        %682 = vmatmul.mubr.f32.gmra.mxu0 %v681
        %v683 = vpop.f32.mrf.mxu0
        %v684 = vadd.f32 %v557, %v683
        %v685 = vpop.f32.mrf.mxu0
        %686 = vmatprep.mubr.f32.mxu0 0.0
        %v687 = vand.u32 %v285, 4294901760
        %v688 = vsub.f32 %v285, %v687
        %689 = vmatmul.mubr.f32.gmra.mxu0 %v688
        %v690 = vpop.f32.mrf.mxu0
        %v691 = vadd.f32 %v563, %v690
        %v692 = vpop.f32.mrf.mxu0
        %693 = vmatprep.mubr.f32.mxu0 0.0
        %v694 = vand.u32 %v288, 4294901760
        %v695 = vsub.f32 %v288, %v694
        %696 = vmatmul.mubr.f32.gmra.mxu0 %v695
        %v697 = vpop.f32.mrf.mxu0
        %v698 = vadd.f32 %v569, %v697
        %v699 = vpop.f32.mrf.mxu0
        %700 = vdwg.mxu0
        %701 = vmatprep.subr.mxu0 0.0
        %702 = vmatpush1.msra.mxu0 0.0
        %703 = vmatprep.subr.mxu0 0.0
        %704 = vmatpush1.msra.mxu0 0.0
        %705 = vmatprep.subr.mxu0 0.0
        %706 = vmatpush1.msra.mxu0 0.0
        %707 = vmatprep.subr.mxu0 0.0
        %708 = vmatpush1.msra.mxu0 0.0
        %709 = vmatprep.subr.mxu0 0.0
        %710 = vmatpush1.msra.mxu0 0.0
        %711 = vmatprep.subr.mxu0 0.0
        %712 = vmatpush1.msra.mxu0 0.0
        %713 = vmatprep.subr.mxu0 0.0
        %714 = vmatpush1.msra.mxu0 0.0
        %715 = vmatprep.subr.mxu0 0.0
        %716 = vmatpush1.msra.mxu0 0.0
        %717 = vmatprep.subr.mxu0 0.0
        %718 = vmatpush1.msra.mxu0 0.0
        %719 = vmatprep.subr.mxu0 0.0
        %720 = vmatpush1.msra.mxu0 0.0
        %721 = vmatprep.subr.mxu0 0.0
        %722 = vmatpush1.msra.mxu0 0.0
        %723 = vmatprep.subr.mxu0 0.0
        %724 = vmatpush1.msra.mxu0 0.0
        %725 = vmatprep.subr.mxu0 0.0
        %v726 = vand.u32 %v257, 4294901760
        %727 = vmatpush1.msra.mxu0 %v726
        %728 = vmatprep.subr.mxu0 0.0
        %v729 = vand.u32 %v256, 4294901760
        %730 = vmatpush1.msra.mxu0 %v729
        %731 = vmatprep.subr.mxu0 0.0
        %v732 = vand.u32 %v255, 4294901760
        %733 = vmatpush1.msra.mxu0 %v732
        %734 = vmatprep.subr.mxu0 0.0
        %v735 = vand.u32 %v254, 4294901760
        %736 = vmatpush1.msra.mxu0 %v735
        %737 = vmatprep.subr.mxu0 0.0
        %738 = vmatpush2.msra.mxu0 0.0
        %739 = vmatprep.subr.mxu0 0.0
        %740 = vmatpush2.msra.mxu0 0.0
        %741 = vmatprep.subr.mxu0 0.0
        %742 = vmatpush2.msra.mxu0 0.0
        %743 = vmatprep.subr.mxu0 0.0
        %744 = vmatpush2.msra.mxu0 0.0
        %745 = vmatprep.subr.mxu0 0.0
        %746 = vmatpush2.msra.mxu0 0.0
        %747 = vmatprep.subr.mxu0 0.0
        %748 = vmatpush2.msra.mxu0 0.0
        %749 = vmatprep.subr.mxu0 0.0
        %750 = vmatpush2.msra.mxu0 0.0
        %751 = vmatprep.subr.mxu0 0.0
        %752 = vmatpush2.msra.mxu0 0.0
        %753 = vmatprep.subr.mxu0 0.0
        %754 = vmatpush2.msra.mxu0 0.0
        %755 = vmatprep.subr.mxu0 0.0
        %756 = vmatpush2.msra.mxu0 0.0
        %757 = vmatprep.subr.mxu0 0.0
        %758 = vmatpush2.msra.mxu0 0.0
        %759 = vmatprep.subr.mxu0 0.0
        %760 = vmatpush2.msra.mxu0 0.0
        %761 = vmatprep.subr.mxu0 0.0
        %762 = vmatpush2.msra.mxu0 0.0
        %763 = vmatprep.subr.mxu0 0.0
        %764 = vmatpush2.msra.mxu0 0.0
        %765 = vmatprep.subr.mxu0 0.0
        %766 = vmatpush2.msra.mxu0 0.0
        %767 = vmatprep.subr.mxu0 0.0
        %768 = vmatpush2.msra.mxu0 0.0
        %769 = vmatprep.mubr.f32.mxu0 0.0
        %v770 = vand.u32 %v267, 4294901760
        %v771 = vsub.f32 %v267, %v770
        %v772 = vand.u32 %v771, 4294901760
        %773 = vmatmul.mubr.f32.gmra.mxu0 %v772
        %v774 = vpop.f32.mrf.mxu0
        %v775 = vadd.f32 %v649, %v774
        %v776 = vpop.f32.mrf.mxu0
        %777 = vmatprep.mubr.f32.mxu0 0.0
        %v778 = vand.u32 %v270, 4294901760
        %v779 = vsub.f32 %v270, %v778
        %v780 = vand.u32 %v779, 4294901760
        %781 = vmatmul.mubr.f32.gmra.mxu0 %v780
        %v782 = vpop.f32.mrf.mxu0
        %v783 = vadd.f32 %v656, %v782
        %v784 = vpop.f32.mrf.mxu0
        %785 = vmatprep.mubr.f32.mxu0 0.0
        %v786 = vand.u32 %v273, 4294901760
        %v787 = vsub.f32 %v273, %v786
        %v788 = vand.u32 %v787, 4294901760
        %789 = vmatmul.mubr.f32.gmra.mxu0 %v788
        %v790 = vpop.f32.mrf.mxu0
        %v791 = vadd.f32 %v663, %v790
        %v792 = vpop.f32.mrf.mxu0
        %793 = vmatprep.mubr.f32.mxu0 0.0
        %v794 = vand.u32 %v276, 4294901760
        %v795 = vsub.f32 %v276, %v794
        %v796 = vand.u32 %v795, 4294901760
        %797 = vmatmul.mubr.f32.gmra.mxu0 %v796
        %v798 = vpop.f32.mrf.mxu0
        %v799 = vadd.f32 %v670, %v798
        %v800 = vpop.f32.mrf.mxu0
        %801 = vmatprep.mubr.f32.mxu0 0.0
        %v802 = vand.u32 %v279, 4294901760
        %v803 = vsub.f32 %v279, %v802
        %v804 = vand.u32 %v803, 4294901760
        %805 = vmatmul.mubr.f32.gmra.mxu0 %v804
        %v806 = vpop.f32.mrf.mxu0
        %v807 = vadd.f32 %v677, %v806
        %v808 = vpop.f32.mrf.mxu0
        %809 = vmatprep.mubr.f32.mxu0 0.0
        %v810 = vand.u32 %v282, 4294901760
        %v811 = vsub.f32 %v282, %v810
        %v812 = vand.u32 %v811, 4294901760
        %813 = vmatmul.mubr.f32.gmra.mxu0 %v812
        %v814 = vpop.f32.mrf.mxu0
        %v815 = vadd.f32 %v684, %v814
        %v816 = vpop.f32.mrf.mxu0
        %817 = vmatprep.mubr.f32.mxu0 0.0
        %v818 = vand.u32 %v285, 4294901760
        %v819 = vsub.f32 %v285, %v818
        %v820 = vand.u32 %v819, 4294901760
        %821 = vmatmul.mubr.f32.gmra.mxu0 %v820
        %v822 = vpop.f32.mrf.mxu0
        %v823 = vadd.f32 %v691, %v822
        %v824 = vpop.f32.mrf.mxu0
        %825 = vmatprep.mubr.f32.mxu0 0.0
        %v826 = vand.u32 %v288, 4294901760
        %v827 = vsub.f32 %v288, %v826
        %v828 = vand.u32 %v827, 4294901760
        %829 = vmatmul.mubr.f32.gmra.mxu0 %v828
        %v830 = vpop.f32.mrf.mxu0
        %v831 = vadd.f32 %v698, %v830
        %v832 = vpop.f32.mrf.mxu0
        %833 = vdwg.mxu0
        %834 = vmatprep.subr.mxu0 0.0
        %835 = vmatpush1.msra.mxu0 0.0
        %836 = vmatprep.subr.mxu0 0.0
        %837 = vmatpush1.msra.mxu0 0.0
        %838 = vmatprep.subr.mxu0 0.0
        %839 = vmatpush1.msra.mxu0 0.0
        %840 = vmatprep.subr.mxu0 0.0
        %841 = vmatpush1.msra.mxu0 0.0
        %842 = vmatprep.subr.mxu0 0.0
        %843 = vmatpush1.msra.mxu0 0.0
        %844 = vmatprep.subr.mxu0 0.0
        %845 = vmatpush1.msra.mxu0 0.0
        %846 = vmatprep.subr.mxu0 0.0
        %847 = vmatpush1.msra.mxu0 0.0
        %848 = vmatprep.subr.mxu0 0.0
        %849 = vmatpush1.msra.mxu0 0.0
        %850 = vmatprep.subr.mxu0 0.0
        %851 = vmatpush1.msra.mxu0 0.0
        %852 = vmatprep.subr.mxu0 0.0
        %853 = vmatpush1.msra.mxu0 0.0
        %854 = vmatprep.subr.mxu0 0.0
        %855 = vmatpush1.msra.mxu0 0.0
        %856 = vmatprep.subr.mxu0 0.0
        %857 = vmatpush1.msra.mxu0 0.0
        %858 = vmatprep.subr.mxu0 0.0
        %v859 = vand.u32 %v257, 4294901760
        %v860 = vsub.f32 %v257, %v859
        %v861 = vand.u32 %v860, 4294901760
        %862 = vmatpush1.msra.mxu0 %v861
        %863 = vmatprep.subr.mxu0 0.0
        %v864 = vand.u32 %v256, 4294901760
        %v865 = vsub.f32 %v256, %v864
        %v866 = vand.u32 %v865, 4294901760
        %867 = vmatpush1.msra.mxu0 %v866
        %868 = vmatprep.subr.mxu0 0.0
        %v869 = vand.u32 %v255, 4294901760
        %v870 = vsub.f32 %v255, %v869
        %v871 = vand.u32 %v870, 4294901760
        %872 = vmatpush1.msra.mxu0 %v871
        %873 = vmatprep.subr.mxu0 0.0
        %v874 = vand.u32 %v254, 4294901760
        %v875 = vsub.f32 %v254, %v874
        %v876 = vand.u32 %v875, 4294901760
        %877 = vmatpush1.msra.mxu0 %v876
        %878 = vmatprep.subr.mxu0 0.0
        %879 = vmatpush2.msra.mxu0 0.0
        %880 = vmatprep.subr.mxu0 0.0
        %881 = vmatpush2.msra.mxu0 0.0
        %882 = vmatprep.subr.mxu0 0.0
        %883 = vmatpush2.msra.mxu0 0.0
        %884 = vmatprep.subr.mxu0 0.0
        %885 = vmatpush2.msra.mxu0 0.0
        %886 = vmatprep.subr.mxu0 0.0
        %887 = vmatpush2.msra.mxu0 0.0
        %888 = vmatprep.subr.mxu0 0.0
        %889 = vmatpush2.msra.mxu0 0.0
        %890 = vmatprep.subr.mxu0 0.0
        %891 = vmatpush2.msra.mxu0 0.0
        %892 = vmatprep.subr.mxu0 0.0
        %893 = vmatpush2.msra.mxu0 0.0
        %894 = vmatprep.subr.mxu0 0.0
        %895 = vmatpush2.msra.mxu0 0.0
        %896 = vmatprep.subr.mxu0 0.0
        %897 = vmatpush2.msra.mxu0 0.0
        %898 = vmatprep.subr.mxu0 0.0
        %899 = vmatpush2.msra.mxu0 0.0
        %900 = vmatprep.subr.mxu0 0.0
        %901 = vmatpush2.msra.mxu0 0.0
        %902 = vmatprep.subr.mxu0 0.0
        %903 = vmatpush2.msra.mxu0 0.0
        %904 = vmatprep.subr.mxu0 0.0
        %905 = vmatpush2.msra.mxu0 0.0
        %906 = vmatprep.subr.mxu0 0.0
        %907 = vmatpush2.msra.mxu0 0.0
        %908 = vmatprep.subr.mxu0 0.0
        %909 = vmatpush2.msra.mxu0 0.0
        %910 = vmatprep.mubr.f32.mxu0 0.0
        %v911 = vand.u32 %v267, 4294901760
        %912 = vmatmul.mubr.f32.gmra.mxu0 %v911
        %v913 = vpop.f32.mrf.mxu0
        %v914 = vadd.f32 %v775, %v913
        %v915 = vpop.f32.mrf.mxu0
        %916 = vmatprep.mubr.f32.mxu0 0.0
        %v917 = vand.u32 %v270, 4294901760
        %918 = vmatmul.mubr.f32.gmra.mxu0 %v917
        %v919 = vpop.f32.mrf.mxu0
        %v920 = vadd.f32 %v783, %v919
        %v921 = vpop.f32.mrf.mxu0
        %922 = vmatprep.mubr.f32.mxu0 0.0
        %v923 = vand.u32 %v273, 4294901760
        %924 = vmatmul.mubr.f32.gmra.mxu0 %v923
        %v925 = vpop.f32.mrf.mxu0
        %v926 = vadd.f32 %v791, %v925
        %v927 = vpop.f32.mrf.mxu0
        %928 = vmatprep.mubr.f32.mxu0 0.0
        %v929 = vand.u32 %v276, 4294901760
        %930 = vmatmul.mubr.f32.gmra.mxu0 %v929
        %v931 = vpop.f32.mrf.mxu0
        %v932 = vadd.f32 %v799, %v931
        %v933 = vpop.f32.mrf.mxu0
        %934 = vmatprep.mubr.f32.mxu0 0.0
        %v935 = vand.u32 %v279, 4294901760
        %936 = vmatmul.mubr.f32.gmra.mxu0 %v935
        %v937 = vpop.f32.mrf.mxu0
        %v938 = vadd.f32 %v807, %v937
        %v939 = vpop.f32.mrf.mxu0
        %940 = vmatprep.mubr.f32.mxu0 0.0
        %v941 = vand.u32 %v282, 4294901760
        %942 = vmatmul.mubr.f32.gmra.mxu0 %v941
        %v943 = vpop.f32.mrf.mxu0
        %v944 = vadd.f32 %v815, %v943
        %v945 = vpop.f32.mrf.mxu0
        %946 = vmatprep.mubr.f32.mxu0 0.0
        %v947 = vand.u32 %v285, 4294901760
        %948 = vmatmul.mubr.f32.gmra.mxu0 %v947
        %v949 = vpop.f32.mrf.mxu0
        %v950 = vadd.f32 %v823, %v949
        %v951 = vpop.f32.mrf.mxu0
        %952 = vmatprep.mubr.f32.mxu0 0.0
        %v953 = vand.u32 %v288, 4294901760
        %954 = vmatmul.mubr.f32.gmra.mxu0 %v953
        %v955 = vpop.f32.mrf.mxu0
        %v956 = vadd.f32 %v831, %v955
        %v957 = vpop.f32.mrf.mxu0
        %958 = vdwg.mxu0
        %959 = vmatprep.subr.mxu0 0.0
        %960 = vmatpush1.msra.mxu0 0.0
        %961 = vmatprep.subr.mxu0 0.0
        %962 = vmatpush1.msra.mxu0 0.0
        %963 = vmatprep.subr.mxu0 0.0
        %964 = vmatpush1.msra.mxu0 0.0
        %965 = vmatprep.subr.mxu0 0.0
        %966 = vmatpush1.msra.mxu0 0.0
        %967 = vmatprep.subr.mxu0 0.0
        %968 = vmatpush1.msra.mxu0 0.0
        %969 = vmatprep.subr.mxu0 0.0
        %970 = vmatpush1.msra.mxu0 0.0
        %971 = vmatprep.subr.mxu0 0.0
        %972 = vmatpush1.msra.mxu0 0.0
        %973 = vmatprep.subr.mxu0 0.0
        %974 = vmatpush1.msra.mxu0 0.0
        %975 = vmatprep.subr.mxu0 0.0
        %976 = vmatpush1.msra.mxu0 0.0
        %977 = vmatprep.subr.mxu0 0.0
        %978 = vmatpush1.msra.mxu0 0.0
        %979 = vmatprep.subr.mxu0 0.0
        %980 = vmatpush1.msra.mxu0 0.0
        %981 = vmatprep.subr.mxu0 0.0
        %982 = vmatpush1.msra.mxu0 0.0
        %983 = vmatprep.subr.mxu0 0.0
        %v984 = vand.u32 %v257, 4294901760
        %985 = vmatpush1.msra.mxu0 %v984
        %986 = vmatprep.subr.mxu0 0.0
        %v987 = vand.u32 %v256, 4294901760
        %988 = vmatpush1.msra.mxu0 %v987
        %989 = vmatprep.subr.mxu0 0.0
        %v990 = vand.u32 %v255, 4294901760
        %991 = vmatpush1.msra.mxu0 %v990
        %992 = vmatprep.subr.mxu0 0.0
        %v993 = vand.u32 %v254, 4294901760
        %994 = vmatpush1.msra.mxu0 %v993
        %995 = vmatprep.subr.mxu0 0.0
        %996 = vmatpush2.msra.mxu0 0.0
        %997 = vmatprep.subr.mxu0 0.0
        %998 = vmatpush2.msra.mxu0 0.0
        %999 = vmatprep.subr.mxu0 0.0
        %1000 = vmatpush2.msra.mxu0 0.0
        %1001 = vmatprep.subr.mxu0 0.0
        %1002 = vmatpush2.msra.mxu0 0.0
        %1003 = vmatprep.subr.mxu0 0.0
        %1004 = vmatpush2.msra.mxu0 0.0
        %1005 = vmatprep.subr.mxu0 0.0
        %1006 = vmatpush2.msra.mxu0 0.0
        %1007 = vmatprep.subr.mxu0 0.0
        %1008 = vmatpush2.msra.mxu0 0.0
        %1009 = vmatprep.subr.mxu0 0.0
        %1010 = vmatpush2.msra.mxu0 0.0
        %1011 = vmatprep.subr.mxu0 0.0
        %1012 = vmatpush2.msra.mxu0 0.0
        %1013 = vmatprep.subr.mxu0 0.0
        %1014 = vmatpush2.msra.mxu0 0.0
        %1015 = vmatprep.subr.mxu0 0.0
        %1016 = vmatpush2.msra.mxu0 0.0
        %1017 = vmatprep.subr.mxu0 0.0
        %1018 = vmatpush2.msra.mxu0 0.0
        %1019 = vmatprep.subr.mxu0 0.0
        %1020 = vmatpush2.msra.mxu0 0.0
        %1021 = vmatprep.subr.mxu0 0.0
        %1022 = vmatpush2.msra.mxu0 0.0
        %1023 = vmatprep.subr.mxu0 0.0
        %1024 = vmatpush2.msra.mxu0 0.0
        %1025 = vmatprep.subr.mxu0 0.0
        %1026 = vmatpush2.msra.mxu0 0.0
        %1027 = vmatprep.mubr.f32.mxu0 0.0
        %v1028 = vand.u32 %v267, 4294901760
        %1029 = vmatmul.mubr.f32.gmra.mxu0 %v1028
        %v1030 = vpop.f32.mrf.mxu0
        %v1031 = vadd.f32 %v914, %v1030
        %v1032 = vpop.f32.mrf.mxu0
        %1033 = vmatprep.mubr.f32.mxu0 0.0
        %v1034 = vand.u32 %v270, 4294901760
        %1035 = vmatmul.mubr.f32.gmra.mxu0 %v1034
        %v1036 = vpop.f32.mrf.mxu0
        %v1037 = vadd.f32 %v920, %v1036
        %v1038 = vpop.f32.mrf.mxu0
        %1039 = vmatprep.mubr.f32.mxu0 0.0
        %v1040 = vand.u32 %v273, 4294901760
        %1041 = vmatmul.mubr.f32.gmra.mxu0 %v1040
        %v1042 = vpop.f32.mrf.mxu0
        %v1043 = vadd.f32 %v926, %v1042
        %v1044 = vpop.f32.mrf.mxu0
        %1045 = vmatprep.mubr.f32.mxu0 0.0
        %v1046 = vand.u32 %v276, 4294901760
        %1047 = vmatmul.mubr.f32.gmra.mxu0 %v1046
        %v1048 = vpop.f32.mrf.mxu0
        %v1049 = vadd.f32 %v932, %v1048
        %v1050 = vpop.f32.mrf.mxu0
        %1051 = vmatprep.mubr.f32.mxu0 0.0
        %v1052 = vand.u32 %v279, 4294901760
        %1053 = vmatmul.mubr.f32.gmra.mxu0 %v1052
        %v1054 = vpop.f32.mrf.mxu0
        %v1055 = vadd.f32 %v938, %v1054
        %v1056 = vpop.f32.mrf.mxu0
        %1057 = vmatprep.mubr.f32.mxu0 0.0
        %v1058 = vand.u32 %v282, 4294901760
        %1059 = vmatmul.mubr.f32.gmra.mxu0 %v1058
        %v1060 = vpop.f32.mrf.mxu0
        %v1061 = vadd.f32 %v944, %v1060
        %v1062 = vpop.f32.mrf.mxu0
        %1063 = vmatprep.mubr.f32.mxu0 0.0
        %v1064 = vand.u32 %v285, 4294901760
        %1065 = vmatmul.mubr.f32.gmra.mxu0 %v1064
        %v1066 = vpop.f32.mrf.mxu0
        %v1067 = vadd.f32 %v950, %v1066
        %v1068 = vpop.f32.mrf.mxu0
        %1069 = vmatprep.mubr.f32.mxu0 0.0
        %v1070 = vand.u32 %v288, 4294901760
        %1071 = vmatmul.mubr.f32.gmra.mxu0 %v1070
        %v1072 = vpop.f32.mrf.mxu0
        %v1073 = vadd.f32 %v956, %v1072
        %v1074 = vpop.f32.mrf.mxu0
        %1075 = vdwg.mxu0
        %v1076 = vtanh.pop %v1031
        %v1077 = vtanh.pop %v1037
        %v1078 = vtanh.pop %v1043
        %v1079 = vtanh.pop %v1049
        %v1080 = vtanh.pop %v1055
        %v1081 = vtanh.pop %v1061
        %v1082 = vtanh.pop %v1067
        %v1083 = vtanh.pop %v1073
        %v1084 = vld [vmem:[#allocation7] sm:$0xff]
        %v1085 = vld [vmem:[#allocation7 + $0x8] sm:$0xff]
        %v1086 = vld [vmem:[#allocation7 + $0x10] sm:$0xff]
        %v1087 = vld [vmem:[#allocation7 + $0x18] sm:$0xff]
        %v1089 = vsel %vm265, %v1076, 0
        %v1092 = vsel %vm265, %v1077, 0
        %v1095 = vsel %vm265, %v1078, 0
        %v1098 = vsel %vm265, %v1079, 0
        %v1101 = vsel %vm265, %v1080, 0
        %v1104 = vsel %vm265, %v1081, 0
        %v1107 = vsel %vm265, %v1082, 0
        %v1110 = vsel %vm265, %v1083, 0
        %1112 = vmatprep.subr.mxu0 0.0
        %1113 = vmatpush1.msra.mxu0 0.0
        %1114 = vmatprep.subr.mxu0 0.0
        %1115 = vmatpush1.msra.mxu0 0.0
        %1116 = vmatprep.subr.mxu0 0.0
        %1117 = vmatpush1.msra.mxu0 0.0
        %1118 = vmatprep.subr.mxu0 0.0
        %1119 = vmatpush1.msra.mxu0 0.0
        %1120 = vmatprep.subr.mxu0 0.0
        %1121 = vmatpush1.msra.mxu0 0.0
        %1122 = vmatprep.subr.mxu0 0.0
        %1123 = vmatpush1.msra.mxu0 0.0
        %1124 = vmatprep.subr.mxu0 0.0
        %1125 = vmatpush1.msra.mxu0 0.0
        %1126 = vmatprep.subr.mxu0 0.0
        %1127 = vmatpush1.msra.mxu0 0.0
        %1128 = vmatprep.subr.mxu0 0.0
        %1129 = vmatpush1.msra.mxu0 0.0
        %1130 = vmatprep.subr.mxu0 0.0
        %1131 = vmatpush1.msra.mxu0 0.0
        %1132 = vmatprep.subr.mxu0 0.0
        %1133 = vmatpush1.msra.mxu0 0.0
        %1134 = vmatprep.subr.mxu0 0.0
        %1135 = vmatpush1.msra.mxu0 0.0
        %1136 = vmatprep.subr.mxu0 0.0
        %v1137 = vand.u32 %v1087, 4294901760
        %1138 = vmatpush1.msra.mxu0 %v1137
        %1139 = vmatprep.subr.mxu0 0.0
        %v1140 = vand.u32 %v1086, 4294901760
        %1141 = vmatpush1.msra.mxu0 %v1140
        %1142 = vmatprep.subr.mxu0 0.0
        %v1143 = vand.u32 %v1085, 4294901760
        %1144 = vmatpush1.msra.mxu0 %v1143
        %1145 = vmatprep.subr.mxu0 0.0
        %v1146 = vand.u32 %v1084, 4294901760
        %1147 = vmatpush1.msra.mxu0 %v1146
        %1148 = vmatprep.subr.mxu0 0.0
        %1149 = vmatpush2.msra.mxu0 0.0
        %1150 = vmatprep.subr.mxu0 0.0
        %1151 = vmatpush2.msra.mxu0 0.0
        %1152 = vmatprep.subr.mxu0 0.0
        %1153 = vmatpush2.msra.mxu0 0.0
        %1154 = vmatprep.subr.mxu0 0.0
        %1155 = vmatpush2.msra.mxu0 0.0
        %1156 = vmatprep.subr.mxu0 0.0
        %1157 = vmatpush2.msra.mxu0 0.0
        %1158 = vmatprep.subr.mxu0 0.0
        %1159 = vmatpush2.msra.mxu0 0.0
        %1160 = vmatprep.subr.mxu0 0.0
        %1161 = vmatpush2.msra.mxu0 0.0
        %1162 = vmatprep.subr.mxu0 0.0
        %1163 = vmatpush2.msra.mxu0 0.0
        %1164 = vmatprep.subr.mxu0 0.0
        %1165 = vmatpush2.msra.mxu0 0.0
        %1166 = vmatprep.subr.mxu0 0.0
        %1167 = vmatpush2.msra.mxu0 0.0
        %1168 = vmatprep.subr.mxu0 0.0
        %1169 = vmatpush2.msra.mxu0 0.0
        %1170 = vmatprep.subr.mxu0 0.0
        %1171 = vmatpush2.msra.mxu0 0.0
        %1172 = vmatprep.subr.mxu0 0.0
        %1173 = vmatpush2.msra.mxu0 0.0
        %1174 = vmatprep.subr.mxu0 0.0
        %1175 = vmatpush2.msra.mxu0 0.0
        %1176 = vmatprep.subr.mxu0 0.0
        %1177 = vmatpush2.msra.mxu0 0.0
        %1178 = vmatprep.subr.mxu0 0.0
        %1179 = vmatpush2.msra.mxu0 0.0
        %1180 = vmatprep.mubr.f32.mxu0 0.0
        %v1181 = vand.u32 %v1089, 4294901760
        %v1182 = vsub.f32 %v1089, %v1181
        %v1183 = vand.u32 %v1182, 4294901760
        %v1184 = vsub.f32 %v1182, %v1183
        %v1185 = vand.u32 %v1184, 4294901760
        %1186 = vmatmul.mubr.f32.gmra.mxu0 %v1185
        %v1187 = vpop.f32.mrf.mxu0
        %v1188 = vadd.f32 0.0, %v1187
        %v1189 = vpop.f32.mrf.mxu0
        %1190 = vmatprep.mubr.f32.mxu0 0.0
        %v1191 = vand.u32 %v1092, 4294901760
        %v1192 = vsub.f32 %v1092, %v1191
        %v1193 = vand.u32 %v1192, 4294901760
        %v1194 = vsub.f32 %v1192, %v1193
        %v1195 = vand.u32 %v1194, 4294901760
        %1196 = vmatmul.mubr.f32.gmra.mxu0 %v1195
        %v1197 = vpop.f32.mrf.mxu0
        %v1198 = vadd.f32 0.0, %v1197
        %v1199 = vpop.f32.mrf.mxu0
        %1200 = vmatprep.mubr.f32.mxu0 0.0
        %v1201 = vand.u32 %v1095, 4294901760
        %v1202 = vsub.f32 %v1095, %v1201
        %v1203 = vand.u32 %v1202, 4294901760
        %v1204 = vsub.f32 %v1202, %v1203
        %v1205 = vand.u32 %v1204, 4294901760
        %1206 = vmatmul.mubr.f32.gmra.mxu0 %v1205
        %v1207 = vpop.f32.mrf.mxu0
        %v1208 = vadd.f32 0.0, %v1207
        %v1209 = vpop.f32.mrf.mxu0
        %1210 = vmatprep.mubr.f32.mxu0 0.0
        %v1211 = vand.u32 %v1098, 4294901760
        %v1212 = vsub.f32 %v1098, %v1211
        %v1213 = vand.u32 %v1212, 4294901760
        %v1214 = vsub.f32 %v1212, %v1213
        %v1215 = vand.u32 %v1214, 4294901760
        %1216 = vmatmul.mubr.f32.gmra.mxu0 %v1215
        %v1217 = vpop.f32.mrf.mxu0
        %v1218 = vadd.f32 0.0, %v1217
        %v1219 = vpop.f32.mrf.mxu0
        %1220 = vmatprep.mubr.f32.mxu0 0.0
        %v1221 = vand.u32 %v1101, 4294901760
        %v1222 = vsub.f32 %v1101, %v1221
        %v1223 = vand.u32 %v1222, 4294901760
        %v1224 = vsub.f32 %v1222, %v1223
        %v1225 = vand.u32 %v1224, 4294901760
        %1226 = vmatmul.mubr.f32.gmra.mxu0 %v1225
        %v1227 = vpop.f32.mrf.mxu0
        %v1228 = vadd.f32 0.0, %v1227
        %v1229 = vpop.f32.mrf.mxu0
        %1230 = vmatprep.mubr.f32.mxu0 0.0
        %v1231 = vand.u32 %v1104, 4294901760
        %v1232 = vsub.f32 %v1104, %v1231
        %v1233 = vand.u32 %v1232, 4294901760
        %v1234 = vsub.f32 %v1232, %v1233
        %v1235 = vand.u32 %v1234, 4294901760
        %1236 = vmatmul.mubr.f32.gmra.mxu0 %v1235
        %v1237 = vpop.f32.mrf.mxu0
        %v1238 = vadd.f32 0.0, %v1237
        %v1239 = vpop.f32.mrf.mxu0
        %1240 = vmatprep.mubr.f32.mxu0 0.0
        %v1241 = vand.u32 %v1107, 4294901760
        %v1242 = vsub.f32 %v1107, %v1241
        %v1243 = vand.u32 %v1242, 4294901760
        %v1244 = vsub.f32 %v1242, %v1243
        %v1245 = vand.u32 %v1244, 4294901760
        %1246 = vmatmul.mubr.f32.gmra.mxu0 %v1245
        %v1247 = vpop.f32.mrf.mxu0
        %v1248 = vadd.f32 0.0, %v1247
        %v1249 = vpop.f32.mrf.mxu0
        %1250 = vmatprep.mubr.f32.mxu0 0.0
        %v1251 = vand.u32 %v1110, 4294901760
        %v1252 = vsub.f32 %v1110, %v1251
        %v1253 = vand.u32 %v1252, 4294901760
        %v1254 = vsub.f32 %v1252, %v1253
        %v1255 = vand.u32 %v1254, 4294901760
        %1256 = vmatmul.mubr.f32.gmra.mxu0 %v1255
        %v1257 = vpop.f32.mrf.mxu0
        %v1258 = vadd.f32 0.0, %v1257
        %v1259 = vpop.f32.mrf.mxu0
        %1260 = vdwg.mxu0
        %1261 = vmatprep.subr.mxu0 0.0
        %1262 = vmatpush1.msra.mxu0 0.0
        %1263 = vmatprep.subr.mxu0 0.0
        %1264 = vmatpush1.msra.mxu0 0.0
        %1265 = vmatprep.subr.mxu0 0.0
        %1266 = vmatpush1.msra.mxu0 0.0
        %1267 = vmatprep.subr.mxu0 0.0
        %1268 = vmatpush1.msra.mxu0 0.0
        %1269 = vmatprep.subr.mxu0 0.0
        %1270 = vmatpush1.msra.mxu0 0.0
        %1271 = vmatprep.subr.mxu0 0.0
        %1272 = vmatpush1.msra.mxu0 0.0
        %1273 = vmatprep.subr.mxu0 0.0
        %1274 = vmatpush1.msra.mxu0 0.0
        %1275 = vmatprep.subr.mxu0 0.0
        %1276 = vmatpush1.msra.mxu0 0.0
        %1277 = vmatprep.subr.mxu0 0.0
        %1278 = vmatpush1.msra.mxu0 0.0
        %1279 = vmatprep.subr.mxu0 0.0
        %1280 = vmatpush1.msra.mxu0 0.0
        %1281 = vmatprep.subr.mxu0 0.0
        %1282 = vmatpush1.msra.mxu0 0.0
        %1283 = vmatprep.subr.mxu0 0.0
        %1284 = vmatpush1.msra.mxu0 0.0
        %1285 = vmatprep.subr.mxu0 0.0
        %v1286 = vand.u32 %v1087, 4294901760
        %v1287 = vsub.f32 %v1087, %v1286
        %v1288 = vand.u32 %v1287, 4294901760
        %v1289 = vsub.f32 %v1287, %v1288
        %v1290 = vand.u32 %v1289, 4294901760
        %1291 = vmatpush1.msra.mxu0 %v1290
        %1292 = vmatprep.subr.mxu0 0.0
        %v1293 = vand.u32 %v1086, 4294901760
        %v1294 = vsub.f32 %v1086, %v1293
        %v1295 = vand.u32 %v1294, 4294901760
        %v1296 = vsub.f32 %v1294, %v1295
        %v1297 = vand.u32 %v1296, 4294901760
        %1298 = vmatpush1.msra.mxu0 %v1297
        %1299 = vmatprep.subr.mxu0 0.0
        %v1300 = vand.u32 %v1085, 4294901760
        %v1301 = vsub.f32 %v1085, %v1300
        %v1302 = vand.u32 %v1301, 4294901760
        %v1303 = vsub.f32 %v1301, %v1302
        %v1304 = vand.u32 %v1303, 4294901760
        %1305 = vmatpush1.msra.mxu0 %v1304
        %1306 = vmatprep.subr.mxu0 0.0
        %v1307 = vand.u32 %v1084, 4294901760
        %v1308 = vsub.f32 %v1084, %v1307
        %v1309 = vand.u32 %v1308, 4294901760
        %v1310 = vsub.f32 %v1308, %v1309
        %v1311 = vand.u32 %v1310, 4294901760
        %1312 = vmatpush1.msra.mxu0 %v1311
        %1313 = vmatprep.subr.mxu0 0.0
        %1314 = vmatpush2.msra.mxu0 0.0
        %1315 = vmatprep.subr.mxu0 0.0
        %1316 = vmatpush2.msra.mxu0 0.0
        %1317 = vmatprep.subr.mxu0 0.0
        %1318 = vmatpush2.msra.mxu0 0.0
        %1319 = vmatprep.subr.mxu0 0.0
        %1320 = vmatpush2.msra.mxu0 0.0
        %1321 = vmatprep.subr.mxu0 0.0
        %1322 = vmatpush2.msra.mxu0 0.0
        %1323 = vmatprep.subr.mxu0 0.0
        %1324 = vmatpush2.msra.mxu0 0.0
        %1325 = vmatprep.subr.mxu0 0.0
        %1326 = vmatpush2.msra.mxu0 0.0
        %1327 = vmatprep.subr.mxu0 0.0
        %1328 = vmatpush2.msra.mxu0 0.0
        %1329 = vmatprep.subr.mxu0 0.0
        %1330 = vmatpush2.msra.mxu0 0.0
        %1331 = vmatprep.subr.mxu0 0.0
        %1332 = vmatpush2.msra.mxu0 0.0
        %1333 = vmatprep.subr.mxu0 0.0
        %1334 = vmatpush2.msra.mxu0 0.0
        %1335 = vmatprep.subr.mxu0 0.0
        %1336 = vmatpush2.msra.mxu0 0.0
        %1337 = vmatprep.subr.mxu0 0.0
        %1338 = vmatpush2.msra.mxu0 0.0
        %1339 = vmatprep.subr.mxu0 0.0
        %1340 = vmatpush2.msra.mxu0 0.0
        %1341 = vmatprep.subr.mxu0 0.0
        %1342 = vmatpush2.msra.mxu0 0.0
        %1343 = vmatprep.subr.mxu0 0.0
        %1344 = vmatpush2.msra.mxu0 0.0
        %1345 = vmatprep.mubr.f32.mxu0 0.0
        %v1346 = vand.u32 %v1089, 4294901760
        %1347 = vmatmul.mubr.f32.gmra.mxu0 %v1346
        %v1348 = vpop.f32.mrf.mxu0
        %v1349 = vadd.f32 %v1188, %v1348
        %v1350 = vpop.f32.mrf.mxu0
        %1351 = vmatprep.mubr.f32.mxu0 0.0
        %v1352 = vand.u32 %v1092, 4294901760
        %1353 = vmatmul.mubr.f32.gmra.mxu0 %v1352
        %v1354 = vpop.f32.mrf.mxu0
        %v1355 = vadd.f32 %v1198, %v1354
        %v1356 = vpop.f32.mrf.mxu0
        %1357 = vmatprep.mubr.f32.mxu0 0.0
        %v1358 = vand.u32 %v1095, 4294901760
        %1359 = vmatmul.mubr.f32.gmra.mxu0 %v1358
        %v1360 = vpop.f32.mrf.mxu0
        %v1361 = vadd.f32 %v1208, %v1360
        %v1362 = vpop.f32.mrf.mxu0
        %1363 = vmatprep.mubr.f32.mxu0 0.0
        %v1364 = vand.u32 %v1098, 4294901760
        %1365 = vmatmul.mubr.f32.gmra.mxu0 %v1364
        %v1366 = vpop.f32.mrf.mxu0
        %v1367 = vadd.f32 %v1218, %v1366
        %v1368 = vpop.f32.mrf.mxu0
        %1369 = vmatprep.mubr.f32.mxu0 0.0
        %v1370 = vand.u32 %v1101, 4294901760
        %1371 = vmatmul.mubr.f32.gmra.mxu0 %v1370
        %v1372 = vpop.f32.mrf.mxu0
        %v1373 = vadd.f32 %v1228, %v1372
        %v1374 = vpop.f32.mrf.mxu0
        %1375 = vmatprep.mubr.f32.mxu0 0.0
        %v1376 = vand.u32 %v1104, 4294901760
        %1377 = vmatmul.mubr.f32.gmra.mxu0 %v1376
        %v1378 = vpop.f32.mrf.mxu0
        %v1379 = vadd.f32 %v1238, %v1378
        %v1380 = vpop.f32.mrf.mxu0
        %1381 = vmatprep.mubr.f32.mxu0 0.0
        %v1382 = vand.u32 %v1107, 4294901760
        %1383 = vmatmul.mubr.f32.gmra.mxu0 %v1382
        %v1384 = vpop.f32.mrf.mxu0
        %v1385 = vadd.f32 %v1248, %v1384
        %v1386 = vpop.f32.mrf.mxu0
        %1387 = vmatprep.mubr.f32.mxu0 0.0
        %v1388 = vand.u32 %v1110, 4294901760
        %1389 = vmatmul.mubr.f32.gmra.mxu0 %v1388
        %v1390 = vpop.f32.mrf.mxu0
        %v1391 = vadd.f32 %v1258, %v1390
        %v1392 = vpop.f32.mrf.mxu0
        %1393 = vdwg.mxu0
        %1394 = vmatprep.subr.mxu0 0.0
        %1395 = vmatpush1.msra.mxu0 0.0
        %1396 = vmatprep.subr.mxu0 0.0
        %1397 = vmatpush1.msra.mxu0 0.0
        %1398 = vmatprep.subr.mxu0 0.0
        %1399 = vmatpush1.msra.mxu0 0.0
        %1400 = vmatprep.subr.mxu0 0.0
        %1401 = vmatpush1.msra.mxu0 0.0
        %1402 = vmatprep.subr.mxu0 0.0
        %1403 = vmatpush1.msra.mxu0 0.0
        %1404 = vmatprep.subr.mxu0 0.0
        %1405 = vmatpush1.msra.mxu0 0.0
        %1406 = vmatprep.subr.mxu0 0.0
        %1407 = vmatpush1.msra.mxu0 0.0
        %1408 = vmatprep.subr.mxu0 0.0
        %1409 = vmatpush1.msra.mxu0 0.0
        %1410 = vmatprep.subr.mxu0 0.0
        %1411 = vmatpush1.msra.mxu0 0.0
        %1412 = vmatprep.subr.mxu0 0.0
        %1413 = vmatpush1.msra.mxu0 0.0
        %1414 = vmatprep.subr.mxu0 0.0
        %1415 = vmatpush1.msra.mxu0 0.0
        %1416 = vmatprep.subr.mxu0 0.0
        %1417 = vmatpush1.msra.mxu0 0.0
        %1418 = vmatprep.subr.mxu0 0.0
        %v1419 = vand.u32 %v1087, 4294901760
        %v1420 = vsub.f32 %v1087, %v1419
        %1421 = vmatpush1.msra.mxu0 %v1420
        %1422 = vmatprep.subr.mxu0 0.0
        %v1423 = vand.u32 %v1086, 4294901760
        %v1424 = vsub.f32 %v1086, %v1423
        %1425 = vmatpush1.msra.mxu0 %v1424
        %1426 = vmatprep.subr.mxu0 0.0
        %v1427 = vand.u32 %v1085, 4294901760
        %v1428 = vsub.f32 %v1085, %v1427
        %1429 = vmatpush1.msra.mxu0 %v1428
        %1430 = vmatprep.subr.mxu0 0.0
        %v1431 = vand.u32 %v1084, 4294901760
        %v1432 = vsub.f32 %v1084, %v1431
        %1433 = vmatpush1.msra.mxu0 %v1432
        %1434 = vmatprep.subr.mxu0 0.0
        %1435 = vmatpush2.msra.mxu0 0.0
        %1436 = vmatprep.subr.mxu0 0.0
        %1437 = vmatpush2.msra.mxu0 0.0
        %1438 = vmatprep.subr.mxu0 0.0
        %1439 = vmatpush2.msra.mxu0 0.0
        %1440 = vmatprep.subr.mxu0 0.0
        %1441 = vmatpush2.msra.mxu0 0.0
        %1442 = vmatprep.subr.mxu0 0.0
        %1443 = vmatpush2.msra.mxu0 0.0
        %1444 = vmatprep.subr.mxu0 0.0
        %1445 = vmatpush2.msra.mxu0 0.0
        %1446 = vmatprep.subr.mxu0 0.0
        %1447 = vmatpush2.msra.mxu0 0.0
        %1448 = vmatprep.subr.mxu0 0.0
        %1449 = vmatpush2.msra.mxu0 0.0
        %1450 = vmatprep.subr.mxu0 0.0
        %1451 = vmatpush2.msra.mxu0 0.0
        %1452 = vmatprep.subr.mxu0 0.0
        %1453 = vmatpush2.msra.mxu0 0.0
        %1454 = vmatprep.subr.mxu0 0.0
        %1455 = vmatpush2.msra.mxu0 0.0
        %1456 = vmatprep.subr.mxu0 0.0
        %1457 = vmatpush2.msra.mxu0 0.0
        %1458 = vmatprep.subr.mxu0 0.0
        %1459 = vmatpush2.msra.mxu0 0.0
        %1460 = vmatprep.subr.mxu0 0.0
        %1461 = vmatpush2.msra.mxu0 0.0
        %1462 = vmatprep.subr.mxu0 0.0
        %1463 = vmatpush2.msra.mxu0 0.0
        %1464 = vmatprep.subr.mxu0 0.0
        %1465 = vmatpush2.msra.mxu0 0.0
        %1466 = vmatprep.mubr.f32.mxu0 0.0
        %v1467 = vand.u32 %v1089, 4294901760
        %v1468 = vsub.f32 %v1089, %v1467
        %1469 = vmatmul.mubr.f32.gmra.mxu0 %v1468
        %v1470 = vpop.f32.mrf.mxu0
        %v1471 = vadd.f32 %v1349, %v1470
        %v1472 = vpop.f32.mrf.mxu0
        %1473 = vmatprep.mubr.f32.mxu0 0.0
        %v1474 = vand.u32 %v1092, 4294901760
        %v1475 = vsub.f32 %v1092, %v1474
        %1476 = vmatmul.mubr.f32.gmra.mxu0 %v1475
        %v1477 = vpop.f32.mrf.mxu0
        %v1478 = vadd.f32 %v1355, %v1477
        %v1479 = vpop.f32.mrf.mxu0
        %1480 = vmatprep.mubr.f32.mxu0 0.0
        %v1481 = vand.u32 %v1095, 4294901760
        %v1482 = vsub.f32 %v1095, %v1481
        %1483 = vmatmul.mubr.f32.gmra.mxu0 %v1482
        %v1484 = vpop.f32.mrf.mxu0
        %v1485 = vadd.f32 %v1361, %v1484
        %v1486 = vpop.f32.mrf.mxu0
        %1487 = vmatprep.mubr.f32.mxu0 0.0
        %v1488 = vand.u32 %v1098, 4294901760
        %v1489 = vsub.f32 %v1098, %v1488
        %1490 = vmatmul.mubr.f32.gmra.mxu0 %v1489
        %v1491 = vpop.f32.mrf.mxu0
        %v1492 = vadd.f32 %v1367, %v1491
        %v1493 = vpop.f32.mrf.mxu0
        %1494 = vmatprep.mubr.f32.mxu0 0.0
        %v1495 = vand.u32 %v1101, 4294901760
        %v1496 = vsub.f32 %v1101, %v1495
        %1497 = vmatmul.mubr.f32.gmra.mxu0 %v1496
        %v1498 = vpop.f32.mrf.mxu0
        %v1499 = vadd.f32 %v1373, %v1498
        %v1500 = vpop.f32.mrf.mxu0
        %1501 = vmatprep.mubr.f32.mxu0 0.0
        %v1502 = vand.u32 %v1104, 4294901760
        %v1503 = vsub.f32 %v1104, %v1502
        %1504 = vmatmul.mubr.f32.gmra.mxu0 %v1503
        %v1505 = vpop.f32.mrf.mxu0
        %v1506 = vadd.f32 %v1379, %v1505
        %v1507 = vpop.f32.mrf.mxu0
        %1508 = vmatprep.mubr.f32.mxu0 0.0
        %v1509 = vand.u32 %v1107, 4294901760
        %v1510 = vsub.f32 %v1107, %v1509
        %1511 = vmatmul.mubr.f32.gmra.mxu0 %v1510
        %v1512 = vpop.f32.mrf.mxu0
        %v1513 = vadd.f32 %v1385, %v1512
        %v1514 = vpop.f32.mrf.mxu0
        %1515 = vmatprep.mubr.f32.mxu0 0.0
        %v1516 = vand.u32 %v1110, 4294901760
        %v1517 = vsub.f32 %v1110, %v1516
        %1518 = vmatmul.mubr.f32.gmra.mxu0 %v1517
        %v1519 = vpop.f32.mrf.mxu0
        %v1520 = vadd.f32 %v1391, %v1519
        %v1521 = vpop.f32.mrf.mxu0
        %1522 = vdwg.mxu0
        %1523 = vmatprep.subr.mxu0 0.0
        %1524 = vmatpush1.msra.mxu0 0.0
        %1525 = vmatprep.subr.mxu0 0.0
        %1526 = vmatpush1.msra.mxu0 0.0
        %1527 = vmatprep.subr.mxu0 0.0
        %1528 = vmatpush1.msra.mxu0 0.0
        %1529 = vmatprep.subr.mxu0 0.0
        %1530 = vmatpush1.msra.mxu0 0.0
        %1531 = vmatprep.subr.mxu0 0.0
        %1532 = vmatpush1.msra.mxu0 0.0
        %1533 = vmatprep.subr.mxu0 0.0
        %1534 = vmatpush1.msra.mxu0 0.0
        %1535 = vmatprep.subr.mxu0 0.0
        %1536 = vmatpush1.msra.mxu0 0.0
        %1537 = vmatprep.subr.mxu0 0.0
        %1538 = vmatpush1.msra.mxu0 0.0
        %1539 = vmatprep.subr.mxu0 0.0
        %1540 = vmatpush1.msra.mxu0 0.0
        %1541 = vmatprep.subr.mxu0 0.0
        %1542 = vmatpush1.msra.mxu0 0.0
        %1543 = vmatprep.subr.mxu0 0.0
        %1544 = vmatpush1.msra.mxu0 0.0
        %1545 = vmatprep.subr.mxu0 0.0
        %1546 = vmatpush1.msra.mxu0 0.0
        %1547 = vmatprep.subr.mxu0 0.0
        %v1548 = vand.u32 %v1087, 4294901760
        %1549 = vmatpush1.msra.mxu0 %v1548
        %1550 = vmatprep.subr.mxu0 0.0
        %v1551 = vand.u32 %v1086, 4294901760
        %1552 = vmatpush1.msra.mxu0 %v1551
        %1553 = vmatprep.subr.mxu0 0.0
        %v1554 = vand.u32 %v1085, 4294901760
        %1555 = vmatpush1.msra.mxu0 %v1554
        %1556 = vmatprep.subr.mxu0 0.0
        %v1557 = vand.u32 %v1084, 4294901760
        %1558 = vmatpush1.msra.mxu0 %v1557
        %1559 = vmatprep.subr.mxu0 0.0
        %1560 = vmatpush2.msra.mxu0 0.0
        %1561 = vmatprep.subr.mxu0 0.0
        %1562 = vmatpush2.msra.mxu0 0.0
        %1563 = vmatprep.subr.mxu0 0.0
        %1564 = vmatpush2.msra.mxu0 0.0
        %1565 = vmatprep.subr.mxu0 0.0
        %1566 = vmatpush2.msra.mxu0 0.0
        %1567 = vmatprep.subr.mxu0 0.0
        %1568 = vmatpush2.msra.mxu0 0.0
        %1569 = vmatprep.subr.mxu0 0.0
        %1570 = vmatpush2.msra.mxu0 0.0
        %1571 = vmatprep.subr.mxu0 0.0
        %1572 = vmatpush2.msra.mxu0 0.0
        %1573 = vmatprep.subr.mxu0 0.0
        %1574 = vmatpush2.msra.mxu0 0.0
        %1575 = vmatprep.subr.mxu0 0.0
        %1576 = vmatpush2.msra.mxu0 0.0
        %1577 = vmatprep.subr.mxu0 0.0
        %1578 = vmatpush2.msra.mxu0 0.0
        %1579 = vmatprep.subr.mxu0 0.0
        %1580 = vmatpush2.msra.mxu0 0.0
        %1581 = vmatprep.subr.mxu0 0.0
        %1582 = vmatpush2.msra.mxu0 0.0
        %1583 = vmatprep.subr.mxu0 0.0
        %1584 = vmatpush2.msra.mxu0 0.0
        %1585 = vmatprep.subr.mxu0 0.0
        %1586 = vmatpush2.msra.mxu0 0.0
        %1587 = vmatprep.subr.mxu0 0.0
        %1588 = vmatpush2.msra.mxu0 0.0
        %1589 = vmatprep.subr.mxu0 0.0
        %1590 = vmatpush2.msra.mxu0 0.0
        %1591 = vmatprep.mubr.f32.mxu0 0.0
        %v1592 = vand.u32 %v1089, 4294901760
        %v1593 = vsub.f32 %v1089, %v1592
        %v1594 = vand.u32 %v1593, 4294901760
        %1595 = vmatmul.mubr.f32.gmra.mxu0 %v1594
        %v1596 = vpop.f32.mrf.mxu0
        %v1597 = vadd.f32 %v1471, %v1596
        %v1598 = vpop.f32.mrf.mxu0
        %1599 = vmatprep.mubr.f32.mxu0 0.0
        %v1600 = vand.u32 %v1092, 4294901760
        %v1601 = vsub.f32 %v1092, %v1600
        %v1602 = vand.u32 %v1601, 4294901760
        %1603 = vmatmul.mubr.f32.gmra.mxu0 %v1602
        %v1604 = vpop.f32.mrf.mxu0
        %v1605 = vadd.f32 %v1478, %v1604
        %v1606 = vpop.f32.mrf.mxu0
        %1607 = vmatprep.mubr.f32.mxu0 0.0
        %v1608 = vand.u32 %v1095, 4294901760
        %v1609 = vsub.f32 %v1095, %v1608
        %v1610 = vand.u32 %v1609, 4294901760
        %1611 = vmatmul.mubr.f32.gmra.mxu0 %v1610
        %v1612 = vpop.f32.mrf.mxu0
        %v1613 = vadd.f32 %v1485, %v1612
        %v1614 = vpop.f32.mrf.mxu0
        %1615 = vmatprep.mubr.f32.mxu0 0.0
        %v1616 = vand.u32 %v1098, 4294901760
        %v1617 = vsub.f32 %v1098, %v1616
        %v1618 = vand.u32 %v1617, 4294901760
        %1619 = vmatmul.mubr.f32.gmra.mxu0 %v1618
        %v1620 = vpop.f32.mrf.mxu0
        %v1621 = vadd.f32 %v1492, %v1620
        %v1622 = vpop.f32.mrf.mxu0
        %1623 = vmatprep.mubr.f32.mxu0 0.0
        %v1624 = vand.u32 %v1101, 4294901760
        %v1625 = vsub.f32 %v1101, %v1624
        %v1626 = vand.u32 %v1625, 4294901760
        %1627 = vmatmul.mubr.f32.gmra.mxu0 %v1626
        %v1628 = vpop.f32.mrf.mxu0
        %v1629 = vadd.f32 %v1499, %v1628
        %v1630 = vpop.f32.mrf.mxu0
        %1631 = vmatprep.mubr.f32.mxu0 0.0
        %v1632 = vand.u32 %v1104, 4294901760
        %v1633 = vsub.f32 %v1104, %v1632
        %v1634 = vand.u32 %v1633, 4294901760
        %1635 = vmatmul.mubr.f32.gmra.mxu0 %v1634
        %v1636 = vpop.f32.mrf.mxu0
        %v1637 = vadd.f32 %v1506, %v1636
        %v1638 = vpop.f32.mrf.mxu0
        %1639 = vmatprep.mubr.f32.mxu0 0.0
        %v1640 = vand.u32 %v1107, 4294901760
        %v1641 = vsub.f32 %v1107, %v1640
        %v1642 = vand.u32 %v1641, 4294901760
        %1643 = vmatmul.mubr.f32.gmra.mxu0 %v1642
        %v1644 = vpop.f32.mrf.mxu0
        %v1645 = vadd.f32 %v1513, %v1644
        %v1646 = vpop.f32.mrf.mxu0
        %1647 = vmatprep.mubr.f32.mxu0 0.0
        %v1648 = vand.u32 %v1110, 4294901760
        %v1649 = vsub.f32 %v1110, %v1648
        %v1650 = vand.u32 %v1649, 4294901760
        %1651 = vmatmul.mubr.f32.gmra.mxu0 %v1650
        %v1652 = vpop.f32.mrf.mxu0
        %v1653 = vadd.f32 %v1520, %v1652
        %v1654 = vpop.f32.mrf.mxu0
        %1655 = vdwg.mxu0
        %1656 = vmatprep.subr.mxu0 0.0
        %1657 = vmatpush1.msra.mxu0 0.0
        %1658 = vmatprep.subr.mxu0 0.0
        %1659 = vmatpush1.msra.mxu0 0.0
        %1660 = vmatprep.subr.mxu0 0.0
        %1661 = vmatpush1.msra.mxu0 0.0
        %1662 = vmatprep.subr.mxu0 0.0
        %1663 = vmatpush1.msra.mxu0 0.0
        %1664 = vmatprep.subr.mxu0 0.0
        %1665 = vmatpush1.msra.mxu0 0.0
        %1666 = vmatprep.subr.mxu0 0.0
        %1667 = vmatpush1.msra.mxu0 0.0
        %1668 = vmatprep.subr.mxu0 0.0
        %1669 = vmatpush1.msra.mxu0 0.0
        %1670 = vmatprep.subr.mxu0 0.0
        %1671 = vmatpush1.msra.mxu0 0.0
        %1672 = vmatprep.subr.mxu0 0.0
        %1673 = vmatpush1.msra.mxu0 0.0
        %1674 = vmatprep.subr.mxu0 0.0
        %1675 = vmatpush1.msra.mxu0 0.0
        %1676 = vmatprep.subr.mxu0 0.0
        %1677 = vmatpush1.msra.mxu0 0.0
        %1678 = vmatprep.subr.mxu0 0.0
        %1679 = vmatpush1.msra.mxu0 0.0
        %1680 = vmatprep.subr.mxu0 0.0
        %v1681 = vand.u32 %v1087, 4294901760
        %v1682 = vsub.f32 %v1087, %v1681
        %v1683 = vand.u32 %v1682, 4294901760
        %1684 = vmatpush1.msra.mxu0 %v1683
        %1685 = vmatprep.subr.mxu0 0.0
        %v1686 = vand.u32 %v1086, 4294901760
        %v1687 = vsub.f32 %v1086, %v1686
        %v1688 = vand.u32 %v1687, 4294901760
        %1689 = vmatpush1.msra.mxu0 %v1688
        %1690 = vmatprep.subr.mxu0 0.0
        %v1691 = vand.u32 %v1085, 4294901760
        %v1692 = vsub.f32 %v1085, %v1691
        %v1693 = vand.u32 %v1692, 4294901760
        %1694 = vmatpush1.msra.mxu0 %v1693
        %1695 = vmatprep.subr.mxu0 0.0
        %v1696 = vand.u32 %v1084, 4294901760
        %v1697 = vsub.f32 %v1084, %v1696
        %v1698 = vand.u32 %v1697, 4294901760
        %1699 = vmatpush1.msra.mxu0 %v1698
        %1700 = vmatprep.subr.mxu0 0.0
        %1701 = vmatpush2.msra.mxu0 0.0
        %1702 = vmatprep.subr.mxu0 0.0
        %1703 = vmatpush2.msra.mxu0 0.0
        %1704 = vmatprep.subr.mxu0 0.0
        %1705 = vmatpush2.msra.mxu0 0.0
        %1706 = vmatprep.subr.mxu0 0.0
        %1707 = vmatpush2.msra.mxu0 0.0
        %1708 = vmatprep.subr.mxu0 0.0
        %1709 = vmatpush2.msra.mxu0 0.0
        %1710 = vmatprep.subr.mxu0 0.0
        %1711 = vmatpush2.msra.mxu0 0.0
        %1712 = vmatprep.subr.mxu0 0.0
        %1713 = vmatpush2.msra.mxu0 0.0
        %1714 = vmatprep.subr.mxu0 0.0
        %1715 = vmatpush2.msra.mxu0 0.0
        %1716 = vmatprep.subr.mxu0 0.0
        %1717 = vmatpush2.msra.mxu0 0.0
        %1718 = vmatprep.subr.mxu0 0.0
        %1719 = vmatpush2.msra.mxu0 0.0
        %1720 = vmatprep.subr.mxu0 0.0
        %1721 = vmatpush2.msra.mxu0 0.0
        %1722 = vmatprep.subr.mxu0 0.0
        %1723 = vmatpush2.msra.mxu0 0.0
        %1724 = vmatprep.subr.mxu0 0.0
        %1725 = vmatpush2.msra.mxu0 0.0
        %1726 = vmatprep.subr.mxu0 0.0
        %1727 = vmatpush2.msra.mxu0 0.0
        %1728 = vmatprep.subr.mxu0 0.0
        %1729 = vmatpush2.msra.mxu0 0.0
        %1730 = vmatprep.subr.mxu0 0.0
        %1731 = vmatpush2.msra.mxu0 0.0
        %1732 = vmatprep.mubr.f32.mxu0 0.0
        %v1733 = vand.u32 %v1089, 4294901760
        %1734 = vmatmul.mubr.f32.gmra.mxu0 %v1733
        %v1735 = vpop.f32.mrf.mxu0
        %v1736 = vadd.f32 %v1597, %v1735
        %v1737 = vpop.f32.mrf.mxu0
        %1738 = vmatprep.mubr.f32.mxu0 0.0
        %v1739 = vand.u32 %v1092, 4294901760
        %1740 = vmatmul.mubr.f32.gmra.mxu0 %v1739
        %v1741 = vpop.f32.mrf.mxu0
        %v1742 = vadd.f32 %v1605, %v1741
        %v1743 = vpop.f32.mrf.mxu0
        %1744 = vmatprep.mubr.f32.mxu0 0.0
        %v1745 = vand.u32 %v1095, 4294901760
        %1746 = vmatmul.mubr.f32.gmra.mxu0 %v1745
        %v1747 = vpop.f32.mrf.mxu0
        %v1748 = vadd.f32 %v1613, %v1747
        %v1749 = vpop.f32.mrf.mxu0
        %1750 = vmatprep.mubr.f32.mxu0 0.0
        %v1751 = vand.u32 %v1098, 4294901760
        %1752 = vmatmul.mubr.f32.gmra.mxu0 %v1751
        %v1753 = vpop.f32.mrf.mxu0
        %v1754 = vadd.f32 %v1621, %v1753
        %v1755 = vpop.f32.mrf.mxu0
        %1756 = vmatprep.mubr.f32.mxu0 0.0
        %v1757 = vand.u32 %v1101, 4294901760
        %1758 = vmatmul.mubr.f32.gmra.mxu0 %v1757
        %v1759 = vpop.f32.mrf.mxu0
        %v1760 = vadd.f32 %v1629, %v1759
        %v1761 = vpop.f32.mrf.mxu0
        %1762 = vmatprep.mubr.f32.mxu0 0.0
        %v1763 = vand.u32 %v1104, 4294901760
        %1764 = vmatmul.mubr.f32.gmra.mxu0 %v1763
        %v1765 = vpop.f32.mrf.mxu0
        %v1766 = vadd.f32 %v1637, %v1765
        %v1767 = vpop.f32.mrf.mxu0
        %1768 = vmatprep.mubr.f32.mxu0 0.0
        %v1769 = vand.u32 %v1107, 4294901760
        %1770 = vmatmul.mubr.f32.gmra.mxu0 %v1769
        %v1771 = vpop.f32.mrf.mxu0
        %v1772 = vadd.f32 %v1645, %v1771
        %v1773 = vpop.f32.mrf.mxu0
        %1774 = vmatprep.mubr.f32.mxu0 0.0
        %v1775 = vand.u32 %v1110, 4294901760
        %1776 = vmatmul.mubr.f32.gmra.mxu0 %v1775
        %v1777 = vpop.f32.mrf.mxu0
        %v1778 = vadd.f32 %v1653, %v1777
        %v1779 = vpop.f32.mrf.mxu0
        %1780 = vdwg.mxu0
        %1781 = vmatprep.subr.mxu0 0.0
        %1782 = vmatpush1.msra.mxu0 0.0
        %1783 = vmatprep.subr.mxu0 0.0
        %1784 = vmatpush1.msra.mxu0 0.0
        %1785 = vmatprep.subr.mxu0 0.0
        %1786 = vmatpush1.msra.mxu0 0.0
        %1787 = vmatprep.subr.mxu0 0.0
        %1788 = vmatpush1.msra.mxu0 0.0
        %1789 = vmatprep.subr.mxu0 0.0
        %1790 = vmatpush1.msra.mxu0 0.0
        %1791 = vmatprep.subr.mxu0 0.0
        %1792 = vmatpush1.msra.mxu0 0.0
        %1793 = vmatprep.subr.mxu0 0.0
        %1794 = vmatpush1.msra.mxu0 0.0
        %1795 = vmatprep.subr.mxu0 0.0
        %1796 = vmatpush1.msra.mxu0 0.0
        %1797 = vmatprep.subr.mxu0 0.0
        %1798 = vmatpush1.msra.mxu0 0.0
        %1799 = vmatprep.subr.mxu0 0.0
        %1800 = vmatpush1.msra.mxu0 0.0
        %1801 = vmatprep.subr.mxu0 0.0
        %1802 = vmatpush1.msra.mxu0 0.0
        %1803 = vmatprep.subr.mxu0 0.0
        %1804 = vmatpush1.msra.mxu0 0.0
        %1805 = vmatprep.subr.mxu0 0.0
        %v1806 = vand.u32 %v1087, 4294901760
        %1807 = vmatpush1.msra.mxu0 %v1806
        %1808 = vmatprep.subr.mxu0 0.0
        %v1809 = vand.u32 %v1086, 4294901760
        %1810 = vmatpush1.msra.mxu0 %v1809
        %1811 = vmatprep.subr.mxu0 0.0
        %v1812 = vand.u32 %v1085, 4294901760
        %1813 = vmatpush1.msra.mxu0 %v1812
        %1814 = vmatprep.subr.mxu0 0.0
        %v1815 = vand.u32 %v1084, 4294901760
        %1816 = vmatpush1.msra.mxu0 %v1815
        %1817 = vmatprep.subr.mxu0 0.0
        %1818 = vmatpush2.msra.mxu0 0.0
        %1819 = vmatprep.subr.mxu0 0.0
        %1820 = vmatpush2.msra.mxu0 0.0
        %1821 = vmatprep.subr.mxu0 0.0
        %1822 = vmatpush2.msra.mxu0 0.0
        %1823 = vmatprep.subr.mxu0 0.0
        %1824 = vmatpush2.msra.mxu0 0.0
        %1825 = vmatprep.subr.mxu0 0.0
        %1826 = vmatpush2.msra.mxu0 0.0
        %1827 = vmatprep.subr.mxu0 0.0
        %1828 = vmatpush2.msra.mxu0 0.0
        %1829 = vmatprep.subr.mxu0 0.0
        %1830 = vmatpush2.msra.mxu0 0.0
        %1831 = vmatprep.subr.mxu0 0.0
        %1832 = vmatpush2.msra.mxu0 0.0
        %1833 = vmatprep.subr.mxu0 0.0
        %1834 = vmatpush2.msra.mxu0 0.0
        %1835 = vmatprep.subr.mxu0 0.0
        %1836 = vmatpush2.msra.mxu0 0.0
        %1837 = vmatprep.subr.mxu0 0.0
        %1838 = vmatpush2.msra.mxu0 0.0
        %1839 = vmatprep.subr.mxu0 0.0
        %1840 = vmatpush2.msra.mxu0 0.0
        %1841 = vmatprep.subr.mxu0 0.0
        %1842 = vmatpush2.msra.mxu0 0.0
        %1843 = vmatprep.subr.mxu0 0.0
        %1844 = vmatpush2.msra.mxu0 0.0
        %1845 = vmatprep.subr.mxu0 0.0
        %1846 = vmatpush2.msra.mxu0 0.0
        %1847 = vmatprep.subr.mxu0 0.0
        %1848 = vmatpush2.msra.mxu0 0.0
        %1849 = vmatprep.mubr.f32.mxu0 0.0
        %v1850 = vand.u32 %v1089, 4294901760
        %1851 = vmatmul.mubr.f32.gmra.mxu0 %v1850
        %v1852 = vpop.f32.mrf.mxu0
        %v1853 = vadd.f32 %v1736, %v1852
        %v1854 = vpop.f32.mrf.mxu0
        %1855 = vmatprep.mubr.f32.mxu0 0.0
        %v1856 = vand.u32 %v1092, 4294901760
        %1857 = vmatmul.mubr.f32.gmra.mxu0 %v1856
        %v1858 = vpop.f32.mrf.mxu0
        %v1859 = vadd.f32 %v1742, %v1858
        %v1860 = vpop.f32.mrf.mxu0
        %1861 = vmatprep.mubr.f32.mxu0 0.0
        %v1862 = vand.u32 %v1095, 4294901760
        %1863 = vmatmul.mubr.f32.gmra.mxu0 %v1862
        %v1864 = vpop.f32.mrf.mxu0
        %v1865 = vadd.f32 %v1748, %v1864
        %v1866 = vpop.f32.mrf.mxu0
        %1867 = vmatprep.mubr.f32.mxu0 0.0
        %v1868 = vand.u32 %v1098, 4294901760
        %1869 = vmatmul.mubr.f32.gmra.mxu0 %v1868
        %v1870 = vpop.f32.mrf.mxu0
        %v1871 = vadd.f32 %v1754, %v1870
        %v1872 = vpop.f32.mrf.mxu0
        %1873 = vmatprep.mubr.f32.mxu0 0.0
        %v1874 = vand.u32 %v1101, 4294901760
        %1875 = vmatmul.mubr.f32.gmra.mxu0 %v1874
        %v1876 = vpop.f32.mrf.mxu0
        %v1877 = vadd.f32 %v1760, %v1876
        %v1878 = vpop.f32.mrf.mxu0
        %1879 = vmatprep.mubr.f32.mxu0 0.0
        %v1880 = vand.u32 %v1104, 4294901760
        %1881 = vmatmul.mubr.f32.gmra.mxu0 %v1880
        %v1882 = vpop.f32.mrf.mxu0
        %v1883 = vadd.f32 %v1766, %v1882
        %v1884 = vpop.f32.mrf.mxu0
        %1885 = vmatprep.mubr.f32.mxu0 0.0
        %v1886 = vand.u32 %v1107, 4294901760
        %1887 = vmatmul.mubr.f32.gmra.mxu0 %v1886
        %v1888 = vpop.f32.mrf.mxu0
        %v1889 = vadd.f32 %v1772, %v1888
        %v1890 = vpop.f32.mrf.mxu0
        %1891 = vmatprep.mubr.f32.mxu0 0.0
        %v1892 = vand.u32 %v1110, 4294901760
        %1893 = vmatmul.mubr.f32.gmra.mxu0 %v1892
        %v1894 = vpop.f32.mrf.mxu0
        %v1895 = vadd.f32 %v1778, %v1894
        %v1896 = vpop.f32.mrf.mxu0
        %1897 = vdwg.mxu0
        %v1898 = vsel %vm265, %v1853, -inf
        %v1899 = vrot.slane %v1898, 4
        %v1900 = vmax.f32 %v1898, %v1899
        %v1901 = vrot.slane %v1900, 2
        %v1902 = vmax.f32 %v1900, %v1901
        %v1903 = vrot.slane %v1902, 1
        %v1904 = vmax.f32 %v1902, %v1903
        %v1905 = vsel %vm265, %v1859, -inf
        %v1906 = vrot.slane %v1905, 4
        %v1907 = vmax.f32 %v1905, %v1906
        %v1908 = vrot.slane %v1907, 2
        %v1909 = vmax.f32 %v1907, %v1908
        %v1910 = vrot.slane %v1909, 1
        %v1911 = vmax.f32 %v1909, %v1910
        %v1912 = vsel %vm265, %v1865, -inf
        %v1913 = vrot.slane %v1912, 4
        %v1914 = vmax.f32 %v1912, %v1913
        %v1915 = vrot.slane %v1914, 2
        %v1916 = vmax.f32 %v1914, %v1915
        %v1917 = vrot.slane %v1916, 1
        %v1918 = vmax.f32 %v1916, %v1917
        %v1919 = vsel %vm265, %v1871, -inf
        %v1920 = vrot.slane %v1919, 4
        %v1921 = vmax.f32 %v1919, %v1920
        %v1922 = vrot.slane %v1921, 2
        %v1923 = vmax.f32 %v1921, %v1922
        %v1924 = vrot.slane %v1923, 1
        %v1925 = vmax.f32 %v1923, %v1924
        %v1926 = vsel %vm265, %v1877, -inf
        %v1927 = vrot.slane %v1926, 4
        %v1928 = vmax.f32 %v1926, %v1927
        %v1929 = vrot.slane %v1928, 2
        %v1930 = vmax.f32 %v1928, %v1929
        %v1931 = vrot.slane %v1930, 1
        %v1932 = vmax.f32 %v1930, %v1931
        %v1933 = vsel %vm265, %v1883, -inf
        %v1934 = vrot.slane %v1933, 4
        %v1935 = vmax.f32 %v1933, %v1934
        %v1936 = vrot.slane %v1935, 2
        %v1937 = vmax.f32 %v1935, %v1936
        %v1938 = vrot.slane %v1937, 1
        %v1939 = vmax.f32 %v1937, %v1938
        %v1940 = vsel %vm265, %v1889, -inf
        %v1941 = vrot.slane %v1940, 4
        %v1942 = vmax.f32 %v1940, %v1941
        %v1943 = vrot.slane %v1942, 2
        %v1944 = vmax.f32 %v1942, %v1943
        %v1945 = vrot.slane %v1944, 1
        %v1946 = vmax.f32 %v1944, %v1945
        %v1947 = vsel %vm265, %v1895, -inf
        %v1948 = vrot.slane %v1947, 4
        %v1949 = vmax.f32 %v1947, %v1948
        %v1950 = vrot.slane %v1949, 2
        %v1951 = vmax.f32 %v1949, %v1950
        %v1952 = vrot.slane %v1951, 1
        %v1953 = vmax.f32 %v1951, %v1952
        %v1954 = vsub.f32 %v1853, %v1904
        %v1955 = vsub.f32 %v1859, %v1911
        %v1956 = vsub.f32 %v1865, %v1918
        %v1957 = vsub.f32 %v1871, %v1925
        %v1958 = vsub.f32 %v1877, %v1932
        %v1959 = vsub.f32 %v1883, %v1939
        %v1960 = vsub.f32 %v1889, %v1946
        %v1961 = vsub.f32 %v1895, %v1953
        %v1962 = vmul.f32 %v1954, 1.442695
        %v1963 = vpow.pop %v1962
        %v1964 = vmul.f32 %v1955, 1.442695
        %v1965 = vpow.pop %v1964
        %v1966 = vmul.f32 %v1956, 1.442695
        %v1967 = vpow.pop %v1966
        %v1968 = vmul.f32 %v1957, 1.442695
        %v1969 = vpow.pop %v1968
        %v1970 = vmul.f32 %v1958, 1.442695
        %v1971 = vpow.pop %v1970
        %v1972 = vmul.f32 %v1959, 1.442695
        %v1973 = vpow.pop %v1972
        %v1974 = vmul.f32 %v1960, 1.442695
        %v1975 = vpow.pop %v1974
        %v1976 = vmul.f32 %v1961, 1.442695
        %v1977 = vpow.pop %v1976
        %v1978 = vsel %vm265, %v1963, 0.0
        %v1979 = vrot.slane %v1978, 4
        %v1980 = vadd.f32 %v1978, %v1979
        %v1981 = vrot.slane %v1980, 2
        %v1982 = vadd.f32 %v1980, %v1981
        %v1983 = vrot.slane %v1982, 1
        %v1984 = vadd.f32 %v1982, %v1983
        %v1985 = vsel %vm265, %v1965, 0.0
        %v1986 = vrot.slane %v1985, 4
        %v1987 = vadd.f32 %v1985, %v1986
        %v1988 = vrot.slane %v1987, 2
        %v1989 = vadd.f32 %v1987, %v1988
        %v1990 = vrot.slane %v1989, 1
        %v1991 = vadd.f32 %v1989, %v1990
        %v1992 = vsel %vm265, %v1967, 0.0
        %v1993 = vrot.slane %v1992, 4
        %v1994 = vadd.f32 %v1992, %v1993
        %v1995 = vrot.slane %v1994, 2
        %v1996 = vadd.f32 %v1994, %v1995
        %v1997 = vrot.slane %v1996, 1
        %v1998 = vadd.f32 %v1996, %v1997
        %v1999 = vsel %vm265, %v1969, 0.0
        %v2000 = vrot.slane %v1999, 4
        %v2001 = vadd.f32 %v1999, %v2000
        %v2002 = vrot.slane %v2001, 2
        %v2003 = vadd.f32 %v2001, %v2002
        %v2004 = vrot.slane %v2003, 1
        %v2005 = vadd.f32 %v2003, %v2004
        %v2006 = vsel %vm265, %v1971, 0.0
        %v2007 = vrot.slane %v2006, 4
        %v2008 = vadd.f32 %v2006, %v2007
        %v2009 = vrot.slane %v2008, 2
        %v2010 = vadd.f32 %v2008, %v2009
        %v2011 = vrot.slane %v2010, 1
        %v2012 = vadd.f32 %v2010, %v2011
        %v2013 = vsel %vm265, %v1973, 0.0
        %v2014 = vrot.slane %v2013, 4
        %v2015 = vadd.f32 %v2013, %v2014
        %v2016 = vrot.slane %v2015, 2
        %v2017 = vadd.f32 %v2015, %v2016
        %v2018 = vrot.slane %v2017, 1
        %v2019 = vadd.f32 %v2017, %v2018
        %v2020 = vsel %vm265, %v1975, 0.0
        %v2021 = vrot.slane %v2020, 4
        %v2022 = vadd.f32 %v2020, %v2021
        %v2023 = vrot.slane %v2022, 2
        %v2024 = vadd.f32 %v2022, %v2023
        %v2025 = vrot.slane %v2024, 1
        %v2026 = vadd.f32 %v2024, %v2025
        %v2027 = vsel %vm265, %v1977, 0.0
        %v2028 = vrot.slane %v2027, 4
        %v2029 = vadd.f32 %v2027, %v2028
        %v2030 = vrot.slane %v2029, 2
        %v2031 = vadd.f32 %v2029, %v2030
        %v2032 = vrot.slane %v2031, 1
        %v2033 = vadd.f32 %v2031, %v2032
        %v2034 = vmul.f32 %v1963, %v246
        %v2035 = vmul.f32 %v1965, %v247
        %v2036 = vmul.f32 %v1967, %v248
        %v2037 = vmul.f32 %v1969, %v249
        %v2038 = vmul.f32 %v1971, %v250
        %v2039 = vmul.f32 %v1973, %v251
        %v2040 = vmul.f32 %v1975, %v252
        %v2041 = vmul.f32 %v1977, %v253
        %v2042 = vsel %vm265, %v2034, 0.0
        %v2043 = vrot.slane %v2042, 4
        %v2044 = vadd.f32 %v2042, %v2043
        %v2045 = vrot.slane %v2044, 2
        %v2046 = vadd.f32 %v2044, %v2045
        %v2047 = vrot.slane %v2046, 1
        %v2048 = vadd.f32 %v2046, %v2047
        %v2049 = vsel %vm265, %v2035, 0.0
        %v2050 = vrot.slane %v2049, 4
        %v2051 = vadd.f32 %v2049, %v2050
        %v2052 = vrot.slane %v2051, 2
        %v2053 = vadd.f32 %v2051, %v2052
        %v2054 = vrot.slane %v2053, 1
        %v2055 = vadd.f32 %v2053, %v2054
        %v2056 = vsel %vm265, %v2036, 0.0
        %v2057 = vrot.slane %v2056, 4
        %v2058 = vadd.f32 %v2056, %v2057
        %v2059 = vrot.slane %v2058, 2
        %v2060 = vadd.f32 %v2058, %v2059
        %v2061 = vrot.slane %v2060, 1
        %v2062 = vadd.f32 %v2060, %v2061
        %v2063 = vsel %vm265, %v2037, 0.0
        %v2064 = vrot.slane %v2063, 4
        %v2065 = vadd.f32 %v2063, %v2064
        %v2066 = vrot.slane %v2065, 2
        %v2067 = vadd.f32 %v2065, %v2066
        %v2068 = vrot.slane %v2067, 1
        %v2069 = vadd.f32 %v2067, %v2068
        %v2070 = vsel %vm265, %v2038, 0.0
        %v2071 = vrot.slane %v2070, 4
        %v2072 = vadd.f32 %v2070, %v2071
        %v2073 = vrot.slane %v2072, 2
        %v2074 = vadd.f32 %v2072, %v2073
        %v2075 = vrot.slane %v2074, 1
        %v2076 = vadd.f32 %v2074, %v2075
        %v2077 = vsel %vm265, %v2039, 0.0
        %v2078 = vrot.slane %v2077, 4
        %v2079 = vadd.f32 %v2077, %v2078
        %v2080 = vrot.slane %v2079, 2
        %v2081 = vadd.f32 %v2079, %v2080
        %v2082 = vrot.slane %v2081, 1
        %v2083 = vadd.f32 %v2081, %v2082
        %v2084 = vsel %vm265, %v2040, 0.0
        %v2085 = vrot.slane %v2084, 4
        %v2086 = vadd.f32 %v2084, %v2085
        %v2087 = vrot.slane %v2086, 2
        %v2088 = vadd.f32 %v2086, %v2087
        %v2089 = vrot.slane %v2088, 1
        %v2090 = vadd.f32 %v2088, %v2089
        %v2091 = vsel %vm265, %v2041, 0.0
        %v2092 = vrot.slane %v2091, 4
        %v2093 = vadd.f32 %v2091, %v2092
        %v2094 = vrot.slane %v2093, 2
        %v2095 = vadd.f32 %v2093, %v2094
        %v2096 = vrot.slane %v2095, 1
        %v2097 = vadd.f32 %v2095, %v2096
        %v2098 = vrcp.pop %v1984
        %v2099 = vmul.f32 %v2048, %v2098
        %v2100 = vrcp.pop %v1991
        %v2101 = vmul.f32 %v2055, %v2100
        %v2102 = vrcp.pop %v1998
        %v2103 = vmul.f32 %v2062, %v2102
        %v2104 = vrcp.pop %v2005
        %v2105 = vmul.f32 %v2069, %v2104
        %v2106 = vrcp.pop %v2012
        %v2107 = vmul.f32 %v2076, %v2106
        %v2108 = vrcp.pop %v2019
        %v2109 = vmul.f32 %v2083, %v2108
        %v2110 = vrcp.pop %v2026
        %v2111 = vmul.f32 %v2090, %v2110
        %v2112 = vrcp.pop %v2033
        %v2113 = vmul.f32 %v2097, %v2112
        %vm2122 = vcmask 1041409
        %v2123 = vsel %vm2122, %v2101, %v2099
        %vm2124 = vcmask 1042434
        %v2125 = vsel %vm2124, %v2103, %v2123
        %vm2126 = vcmask 1043459
        %v2127 = vsel %vm2126, %v2105, %v2125
        %vm2128 = vcmask 1044484
        %v2129 = vsel %vm2128, %v2107, %v2127
        %vm2130 = vcmask 1045509
        %v2131 = vsel %vm2130, %v2109, %v2129
        %vm2132 = vcmask 1046534
        %v2133 = vsel %vm2132, %v2111, %v2131
        %vm2134 = vcmask 1047559
        %v2135 = vsel %vm2134, %v2113, %v2133
        %2137 = vst.msk [vmem:[%s244] sm:$0xff] %vm265, %v2135
        %s2138 = sand.u32 %s119, 1
        %s2139 = scalar_lea.sflag [#allocation4], %s2138
        %s2140 = sand.u32 %s119, 1
        %s2141 = smul.addr %s2140, 8
        %s2142 = scalar_lea.vmem [#allocation8], %s2141
        // Predicated region
        $region49: #{tpu_custom_call.1} parent=35 // pred_check
          %p2143 = pneg %p129
        $region50: #{tpu_custom_call.1} parent=35 // pred_check_branch
          %2145 = sbr.rel (%p2143) target = $region52
        $region51: #{tpu_custom_call.1} parent=35 // pred_region
          %s2147 = ssub.s32 128, 128
          %2148 = vsyncadd %s2139, %s2147
          %s2149 = smul.addr %s22, 128
          %s2150 = scalar_lea.hbm %s4, %s2149
          %s2152 = sshll.u32 %s2142, 4
          %s2153 = int_to_ptr.vmem [resolvable:$true] %s2152
          %2155 = dma.vmem_to_hbm [thread:$0]  %s2153, 128, %s2150, %s2139
        $region52: #{tpu_custom_call.1} parent=35 // pred_fallthru
          _
      $region36: #{tpu_custom_call.1} parent=5 // pred_fallthru
        _
      %p2156 = scmp.le.s32.totalorder 2, %s17
      // Predicated region
      $region53: #{tpu_custom_call.1} parent=5 // pred_check
        %p2157 = pneg %p2156
      $region54: #{tpu_custom_call.1} parent=5 // pred_check_branch
        %2159 = sbr.rel (%p2157) target = $region56
      $region55: #{tpu_custom_call.1} parent=5 // pred_region
        %s2160 = ssub.s32 %s17, 2
        // Predicated region
        $region57: #{tpu_custom_call.1} parent=55 // pred_check
          %p2161 = pneg %p135
        $region58: #{tpu_custom_call.1} parent=55 // pred_check_branch
          %2163 = sbr.rel (%p2161) target = $region60
        $region59: #{tpu_custom_call.1} parent=55 // pred_region
          %s2164 = sand.u32 %s120, 1
          %s2165 = scalar_lea.sflag [#allocation4], %s2164
          %s2166 = sand.u32 %s120, 1
          %s2167 = smul.addr %s2166, 8
          %s2168 = scalar_lea.vmem [#allocation8], %s2167
          %2169 = dma.done %s2165, 128
        $region60: #{tpu_custom_call.1} parent=55 // pred_fallthru
          _
      $region56: #{tpu_custom_call.1} parent=5 // pred_fallthru
        _
    $region6: #{tpu_custom_call.1} parent=1 // loop_footer
      %s21 = sadd.s32 1, %s17
    $region7: #{tpu_custom_call.1} parent=1 // loop_footer_branch
      %16 = sbr.rel target = $region3
    $region8: #{tpu_custom_call.1} parent=1 // loop_exit
      _
    %2170 = vsyncpa [#allocation3], 1
    %s2171 = scalar_lea.sflag [#allocation3], 1
    %2172 = vsyncpa %s2171, 1
    %2173 = vsyncpa [#allocation6], 1
    %2174 = vsyncpa [#allocation4], 1
    %s2175 = scalar_lea.sflag [#allocation4], 1
    %2176 = vsyncpa %s2175, 1

</llo_original>
